<compile_context>
chip_gen: v5e
topology: v5e:2x2
jax: 0.10.0
libtpu: 0.0.40
codegen_flags: <defaults>
</compile_context>

<pallas_src>
import functools

import jax
import jax.numpy as jnp
import numpy as np
from jax import lax
from jax.experimental import pallas as pl
from jax.experimental.pallas import tpu as pltpu  # noqa: F401  (imported for TPU backend use)

POOL_DEPTH = 100          # Conv2d output channels per branch (module constant)
D_PAD = 128               # pooled depth padded to lane width
BN_EPS = 1e-5
NEG_INF = -1e30


def _round_up(x, m):
    return (x + m - 1) // m * m


# ---------------------------------------------------------------------------
# Fused kernel: conv(all branches) + global max pool + fc1 + BN + ReLU + fc2
#               + log_softmax + NLL, single block, whole arrays in VMEM.
# ---------------------------------------------------------------------------
def _fused_kernel(patches_ref, wc_ref, bc_ref, w1_ref, b1_ref, g_ref, bt_ref,
                  w2_ref, b2_ref, y_ref, out_ref, *, B, P_PAD):
    # Conv2d(Ci, 100, 3) for every branch as ONE block-diagonal MXU matmul.
    y = jnp.dot(patches_ref[...], wc_ref[...],
                preferred_element_type=jnp.float32)             # [B*P_PAD, L*D_PAD]

    # AdaptiveMaxPool2d(1): per-batch max over the patch axis.  Padded patch rows are
    # edge-replicated copies of real rows, so they never change the max.  Slices start
    # at multiples of 8 (P_PAD % 8 == 0) -> aligned, unmasked accesses.
    feats = [jnp.max(y[b * P_PAD:(b + 1) * P_PAD, :], axis=0, keepdims=True)
             for b in range(B)]
    # Conv bias after the max: max(y + b) == max(y) + b (per-channel constant).
    feature = jnp.concatenate(feats, axis=0) + bc_ref[...]      # [B, L*D_PAD]

    # fc1 + BatchNorm1d (training-mode batch stats, biased variance) + ReLU.
    h = jnp.dot(feature.astype(jnp.bfloat16), w1_ref[...],
                preferred_element_type=jnp.float32) + b1_ref[...]
    mean = jnp.mean(h, axis=0, keepdims=True)
    var = jnp.mean((h - mean) ** 2, axis=0, keepdims=True)
    h = (h - mean) * lax.rsqrt(var + BN_EPS)
    h = jnp.maximum(h * g_ref[...] + bt_ref[...], 0.0)

    # fc2 + log_softmax.  Padded class columns carry a -1e30 bias -> excluded.
    logits = jnp.dot(h.astype(jnp.bfloat16), w2_ref[...],
                     preferred_element_type=jnp.float32) + b2_ref[...]
    m = jnp.max(logits, axis=1, keepdims=True)
    lse = m + jnp.log(jnp.sum(jnp.exp(logits - m), axis=1, keepdims=True))
    logp = logits - lse                                          # [B, NC_PAD]

    # NLLLoss(mean): select target log-prob via iota == y (no one-hot input needed).
    cls = lax.broadcasted_iota(jnp.int32, logp.shape, 1)
    picked = jnp.sum(jnp.where(cls == y_ref[...], logp, 0.0), axis=1, keepdims=True)
    out_ref[...] = -jnp.sum(picked, axis=0, keepdims=True) / B   # [1, 1]


# ---------------------------------------------------------------------------
# Wrapper: im2col + branch packing (layout plumbing), then one pallas_call.
# ---------------------------------------------------------------------------
def dann_head_forward(inputs, y_true, params):
    """Full Dann_Head.forward. Returns scalar NLL loss (float32)."""
    conv_ws, conv_bs, W1, b1, gamma, beta, W2, b2 = params
    L = len(conv_ws)
    num_classes = W2.shape[1]
    HID = W1.shape[1]
    HID_PAD = _round_up(HID, 128)
    NC_PAD = _round_up(num_classes, 128)
    F_PAD = L * D_PAD

    B, _, H, W = inputs[0].shape
    Ho, Wo = H - 2, W - 2
    P = Ho * Wo
    P_PAD = _round_up(P, 8)
    Ks = [9 * x.shape[1] for x in inputs]
    K_TOT = sum(Ks)
    K_PAD = _round_up(K_TOT, 128)

    # --- glue: im2col + pack all branches along K (matmuls themselves run in-kernel) ---
    patch_list = []
    for x in inputs:
        xn = jnp.transpose(x, (0, 2, 3, 1)).astype(jnp.float32)         # NHWC
        taps = [xn[:, kh:kh + Ho, kw:kw + Wo, :] for kh in range(3) for kw in range(3)]
        patch_list.append(jnp.concatenate(taps, axis=-1).reshape(B, P, -1))
    patches = jnp.concatenate(patch_list, axis=-1)                      # [B, P, K_TOT]
    patches = jnp.pad(patches, ((0, 0), (0, P_PAD - P), (0, 0)), mode="edge")
    patches = jnp.pad(patches, ((0, 0), (0, 0), (0, K_PAD - K_TOT)))
    patches = patches.reshape(B * P_PAD, K_PAD).astype(jnp.bfloat16)

    # Block-diagonal conv weights/bias: one matmul = all branch convs + the feature concat.
    wc = jnp.zeros((K_PAD, F_PAD), jnp.float32)
    bc = jnp.zeros((1, F_PAD), jnp.float32)
    koff = 0
    for i, (w, b) in enumerate(zip(conv_ws, conv_bs)):
        kmat = jnp.transpose(w, (2, 3, 1, 0)).reshape(Ks[i], POOL_DEPTH)
        wc = wc.at[koff:koff + Ks[i], i * D_PAD:i * D_PAD + POOL_DEPTH].set(kmat)
        bc = bc.at[0, i * D_PAD:i * D_PAD + POOL_DEPTH].set(b)
        koff += Ks[i]
    wc = wc.astype(jnp.bfloat16)

    # Classifier params padded to lane-friendly shapes (pad rows/cols are zero so they
    # contribute nothing; padded class logits get a -1e30 bias).
    w1p = jnp.zeros((F_PAD, HID_PAD), jnp.float32)
    for i in range(L):
        w1p = w1p.at[i * D_PAD:i * D_PAD + POOL_DEPTH, :HID].set(
            W1[i * POOL_DEPTH:(i + 1) * POOL_DEPTH, :])
    w1p = w1p.astype(jnp.bfloat16)
    b1p = jnp.zeros((1, HID_PAD), jnp.float32).at[0, :HID].set(b1)
    gp = jnp.zeros((1, HID_PAD), jnp.float32).at[0, :HID].set(gamma)
    btp = jnp.zeros((1, HID_PAD), jnp.float32).at[0, :HID].set(beta)
    w2p = jnp.zeros((HID_PAD, NC_PAD), jnp.float32).at[:HID, :num_classes].set(W2)
    w2p = w2p.astype(jnp.bfloat16)
    b2p = jnp.full((1, NC_PAD), NEG_INF, jnp.float32).at[0, :num_classes].set(b2)

    y2d = y_true.astype(jnp.int32).reshape(B, 1)

    kernel = functools.partial(_fused_kernel, B=B, P_PAD=P_PAD)
    loss = pl.pallas_call(
        kernel,
        out_shape=jax.ShapeDtypeStruct((1, 1), jnp.float32),
    )(patches, wc, bc, w1p, b1p, gp, btp, w2p, b2p, y2d)
    return loss[0, 0]


# ---------------------------------------------------------------------------
# Pure-JAX reference (independent formulation; same bf16-operand / f32-accumulate
# precision choice as the kernel so the comparison is tight and deterministic).
# ---------------------------------------------------------------------------
def reference_forward(inputs, y_true, params):
    conv_ws, conv_bs, W1, b1, gamma, beta, W2, b2 = params
    feats = []
    for x, w, b in zip(inputs, conv_ws, conv_bs):
        y = lax.conv_general_dilated(
            x.astype(jnp.bfloat16), w.astype(jnp.bfloat16), (1, 1), "VALID",
            dimension_numbers=("NCHW", "OIHW", "NCHW"),
            preferred_element_type=jnp.float32)
        y = y + b[None, :, None, None]
        feats.append(jnp.max(y, axis=(2, 3)))
    feature = jnp.concatenate(feats, axis=1)
    h = jnp.dot(feature.astype(jnp.bfloat16), W1.astype(jnp.bfloat16),
                preferred_element_type=jnp.float32) + b1
    mean = jnp.mean(h, axis=0, keepdims=True)
    var = jnp.mean((h - mean) ** 2, axis=0, keepdims=True)
    h = (h - mean) / jnp.sqrt(var + BN_EPS) * gamma + beta
    h = jnp.maximum(h, 0.0)
    logits = jnp.dot(h.astype(jnp.bfloat16), W2.astype(jnp.bfloat16),
                     preferred_element_type=jnp.float32) + b2
    logp = jax.nn.log_softmax(logits, axis=1)
    picked = jnp.take_along_axis(logp, y_true[:, None], axis=1)[:, 0]
    return -jnp.mean(picked)


if __name__ == "__main__":
    # Small, module-consistent shapes: Dann_Head(input_dims=[4, 6], num_classes=3).
    input_dims = (4, 6)
    num_classes = 3
    B, H, W = 4, 16, 16

    key = jax.random.PRNGKey(0)
    ks = jax.random.split(key, 12)

    # Deterministic synthetic parameters (shapes match nn.Module __init__).
    conv_ws = [0.1 * jax.random.normal(ks[i], (POOL_DEPTH, c, 3, 3), jnp.float32)
               for i, c in enumerate(input_dims)]
    conv_bs = [0.1 * jax.random.normal(ks[2 + i], (POOL_DEPTH,), jnp.float32)
               for i in range(len(input_dims))]
    F = POOL_DEPTH * len(input_dims)
    W1 = 0.1 * jax.random.normal(ks[4], (F, 100), jnp.float32)
    b1 = 0.1 * jax.random.normal(ks[5], (100,), jnp.float32)
    gamma = 1.0 + 0.1 * jax.random.normal(ks[6], (100,), jnp.float32)
    beta = 0.1 * jax.random.normal(ks[7], (100,), jnp.float32)
    W2 = 0.1 * jax.random.normal(ks[8], (100, num_classes), jnp.float32)
    b2 = 0.1 * jax.random.normal(ks[9], (num_classes,), jnp.float32)
    params = (conv_ws, conv_bs, W1, b1, gamma, beta, W2, b2)

    # Inputs (NCHW, as in PyTorch) and integer targets.
    x0 = jax.random.normal(ks[10], (B, input_dims[0], H, W), jnp.float32)
    x1 = jax.random.normal(ks[11], (B, input_dims[1], H, W), jnp.float32)
    y_true = jax.random.randint(ks[0], (B,), 0, num_classes)

    loss = jax.jit(dann_head_forward)([x0, x1], y_true, params)
    loss = jax.block_until_ready(loss)

    ref = jax.block_until_ready(reference_forward([x0, x1], y_true, params))
    np.testing.assert_allclose(float(loss), float(ref), rtol=2e-3, atol=2e-3)

    # TODO(synk): ReverseLayerF / DANN_module's lambda only alter the backward pass; a
    # forward-only kernel needs no custom_vjp, so they are represented as identity here.
    print("KERNEL_OK")
</pallas_src>

<mosaic_0001>
module attributes {stable_mosaic.version = 11 : i64} {
  func.func @_fused_kernel(%arg0: memref<800x128xbf16, #tpu.memory_space<vmem>>, %arg1: memref<128x256xbf16, #tpu.memory_space<vmem>>, %arg2: memref<1x256xf32, #tpu.memory_space<vmem>>, %arg3: memref<256x128xbf16, #tpu.memory_space<vmem>>, %arg4: memref<1x128xf32, #tpu.memory_space<vmem>>, %arg5: memref<1x128xf32, #tpu.memory_space<vmem>>, %arg6: memref<1x128xf32, #tpu.memory_space<vmem>>, %arg7: memref<128x128xbf16, #tpu.memory_space<vmem>>, %arg8: memref<1x128xf32, #tpu.memory_space<vmem>>, %arg9: memref<4x1xi32, #tpu.memory_space<vmem>>, %arg10: memref<1x1xf32, #tpu.memory_space<vmem>>) attributes {dimension_semantics = [], scalar_prefetch = 0 : i64, scratch_operands = 0 : i64, tpu.core_type = #tpu.core_type<tc>} {
    %c0 = arith.constant 0 : index
    %c0_0 = arith.constant 0 : index
    %0 = vector.load %arg0[%c0, %c0_0] : memref<800x128xbf16, #tpu.memory_space<vmem>>, vector<800x128xbf16>
    %c0_1 = arith.constant 0 : index
    %c0_2 = arith.constant 0 : index
    %1 = vector.load %arg1[%c0_1, %c0_2] : memref<128x256xbf16, #tpu.memory_space<vmem>>, vector<128x256xbf16>
    %cst = arith.constant dense<0.000000e+00> : vector<800x256xf32>
    %2 = tpu.matmul %0, %1, %cst {dimension_numbers = #tpu.dot_dimension_numbers<[1], [0], [0], [1], [0, 0, 1, 1], [], []>} : vector<800x128xbf16>, vector<128x256xbf16>, vector<800x256xf32> -> vector<800x256xf32>
    %3 = vector.extract_strided_slice %2 {offsets = [0, 0], sizes = [200, 256], strides = [1, 1]} : vector<800x256xf32> to vector<200x256xf32>
    %cst_3 = arith.constant dense<0xFF800000> : vector<256xf32>
    %4 = vector.multi_reduction <maximumf>, %3, %cst_3 [0] : vector<200x256xf32> to vector<256xf32>
    %5 = vector.shape_cast %4 : vector<256xf32> to vector<1x256xf32>
    %6 = vector.extract_strided_slice %2 {offsets = [200, 0], sizes = [200, 256], strides = [1, 1]} : vector<800x256xf32> to vector<200x256xf32>
    %cst_4 = arith.constant dense<0xFF800000> : vector<256xf32>
    %7 = vector.multi_reduction <maximumf>, %6, %cst_4 [0] : vector<200x256xf32> to vector<256xf32>
    %8 = vector.shape_cast %7 : vector<256xf32> to vector<1x256xf32>
    %9 = vector.extract_strided_slice %2 {offsets = [400, 0], sizes = [200, 256], strides = [1, 1]} : vector<800x256xf32> to vector<200x256xf32>
    %cst_5 = arith.constant dense<0xFF800000> : vector<256xf32>
    %10 = vector.multi_reduction <maximumf>, %9, %cst_5 [0] : vector<200x256xf32> to vector<256xf32>
    %11 = vector.shape_cast %10 : vector<256xf32> to vector<1x256xf32>
    %12 = vector.extract_strided_slice %2 {offsets = [600, 0], sizes = [200, 256], strides = [1, 1]} : vector<800x256xf32> to vector<200x256xf32>
    %cst_6 = arith.constant dense<0xFF800000> : vector<256xf32>
    %13 = vector.multi_reduction <maximumf>, %12, %cst_6 [0] : vector<200x256xf32> to vector<256xf32>
    %14 = vector.shape_cast %13 : vector<256xf32> to vector<1x256xf32>
    %15 = tpu.concatenate %5, %8, %11, %14 in 0 : vector<1x256xf32>, vector<1x256xf32>, vector<1x256xf32>, vector<1x256xf32> -> vector<4x256xf32>
    %c0_7 = arith.constant 0 : index
    %c0_8 = arith.constant 0 : index
    %16 = vector.load %arg2[%c0_7, %c0_8] : memref<1x256xf32, #tpu.memory_space<vmem>>, vector<1x256xf32>
    %17 = vector.broadcast %16 : vector<1x256xf32> to vector<4x256xf32>
    %18 = arith.addf %15, %17 : vector<4x256xf32>
    %19 = arith.truncf %18 : vector<4x256xf32> to vector<4x256xbf16>
    %c0_9 = arith.constant 0 : index
    %c0_10 = arith.constant 0 : index
    %20 = vector.load %arg3[%c0_9, %c0_10] : memref<256x128xbf16, #tpu.memory_space<vmem>>, vector<256x128xbf16>
    %cst_11 = arith.constant dense<0.000000e+00> : vector<4x128xf32>
    %21 = tpu.matmul %19, %20, %cst_11 {dimension_numbers = #tpu.dot_dimension_numbers<[1], [0], [0], [1], [0, 0, 1, 1], [], []>} : vector<4x256xbf16>, vector<256x128xbf16>, vector<4x128xf32> -> vector<4x128xf32>
    %c0_12 = arith.constant 0 : index
    %c0_13 = arith.constant 0 : index
    %22 = vector.load %arg4[%c0_12, %c0_13] : memref<1x128xf32, #tpu.memory_space<vmem>>, vector<1x128xf32>
    %23 = vector.broadcast %22 : vector<1x128xf32> to vector<4x128xf32>
    %24 = arith.addf %21, %23 : vector<4x128xf32>
    %cst_14 = arith.constant dense<0.000000e+00> : vector<128xf32>
    %25 = vector.multi_reduction <add>, %24, %cst_14 [0] : vector<4x128xf32> to vector<128xf32>
    %26 = vector.shape_cast %25 : vector<128xf32> to vector<1x128xf32>
    %cst_15 = arith.constant 4.000000e+00 : f32
    %27 = vector.broadcast %cst_15 : f32 to vector<1x128xf32>
    %28 = arith.divf %26, %27 : vector<1x128xf32>
    %29 = vector.broadcast %28 : vector<1x128xf32> to vector<4x128xf32>
    %30 = arith.subf %24, %29 : vector<4x128xf32>
    %31 = arith.mulf %30, %30 : vector<4x128xf32>
    %cst_16 = arith.constant dense<0.000000e+00> : vector<128xf32>
    %32 = vector.multi_reduction <add>, %31, %cst_16 [0] : vector<4x128xf32> to vector<128xf32>
    %33 = vector.shape_cast %32 : vector<128xf32> to vector<1x128xf32>
    %cst_17 = arith.constant 4.000000e+00 : f32
    %34 = vector.broadcast %cst_17 : f32 to vector<1x128xf32>
    %35 = arith.divf %33, %34 : vector<1x128xf32>
    %36 = vector.broadcast %28 : vector<1x128xf32> to vector<4x128xf32>
    %37 = arith.subf %24, %36 : vector<4x128xf32>
    %cst_18 = arith.constant 9.99999974E-6 : f32
    %38 = vector.broadcast %cst_18 : f32 to vector<1x128xf32>
    %39 = arith.addf %35, %38 : vector<1x128xf32>
    %40 = math.rsqrt %39 : vector<1x128xf32>
    %41 = vector.broadcast %40 : vector<1x128xf32> to vector<4x128xf32>
    %42 = arith.mulf %37, %41 : vector<4x128xf32>
    %c0_19 = arith.constant 0 : index
    %c0_20 = arith.constant 0 : index
    %43 = vector.load %arg5[%c0_19, %c0_20] : memref<1x128xf32, #tpu.memory_space<vmem>>, vector<1x128xf32>
    %44 = vector.broadcast %43 : vector<1x128xf32> to vector<4x128xf32>
    %45 = arith.mulf %42, %44 : vector<4x128xf32>
    %c0_21 = arith.constant 0 : index
    %c0_22 = arith.constant 0 : index
    %46 = vector.load %arg6[%c0_21, %c0_22] : memref<1x128xf32, #tpu.memory_space<vmem>>, vector<1x128xf32>
    %47 = vector.broadcast %46 : vector<1x128xf32> to vector<4x128xf32>
    %48 = arith.addf %45, %47 : vector<4x128xf32>
    %cst_23 = arith.constant 0.000000e+00 : f32
    %49 = vector.broadcast %cst_23 : f32 to vector<4x128xf32>
    %50 = arith.maximumf %48, %49 : vector<4x128xf32>
    %51 = arith.truncf %50 : vector<4x128xf32> to vector<4x128xbf16>
    %c0_24 = arith.constant 0 : index
    %c0_25 = arith.constant 0 : index
    %52 = vector.load %arg7[%c0_24, %c0_25] : memref<128x128xbf16, #tpu.memory_space<vmem>>, vector<128x128xbf16>
    %cst_26 = arith.constant dense<0.000000e+00> : vector<4x128xf32>
    %53 = tpu.matmul %51, %52, %cst_26 {dimension_numbers = #tpu.dot_dimension_numbers<[1], [0], [0], [1], [0, 0, 1, 1], [], []>} : vector<4x128xbf16>, vector<128x128xbf16>, vector<4x128xf32> -> vector<4x128xf32>
    %c0_27 = arith.constant 0 : index
    %c0_28 = arith.constant 0 : index
    %54 = vector.load %arg8[%c0_27, %c0_28] : memref<1x128xf32, #tpu.memory_space<vmem>>, vector<1x128xf32>
    %55 = vector.broadcast %54 : vector<1x128xf32> to vector<4x128xf32>
    %56 = arith.addf %53, %55 : vector<4x128xf32>
    %cst_29 = arith.constant dense<0xFF800000> : vector<4xf32>
    %57 = vector.multi_reduction <maximumf>, %56, %cst_29 [1] : vector<4x128xf32> to vector<4xf32>
    %58 = vector.shape_cast %57 : vector<4xf32> to vector<4x1xf32>
    %59 = vector.broadcast %58 : vector<4x1xf32> to vector<4x128xf32>
    %60 = arith.subf %56, %59 : vector<4x128xf32>
    %61 = math.exp %60 : vector<4x128xf32>
    %cst_30 = arith.constant dense<0.000000e+00> : vector<4xf32>
    %62 = vector.multi_reduction <add>, %61, %cst_30 [1] : vector<4x128xf32> to vector<4xf32>
    %63 = vector.shape_cast %62 : vector<4xf32> to vector<4x1xf32>
    %64 = math.log %63 : vector<4x1xf32>
    %65 = arith.addf %58, %64 : vector<4x1xf32>
    %66 = vector.broadcast %65 : vector<4x1xf32> to vector<4x128xf32>
    %67 = arith.subf %56, %66 : vector<4x128xf32>
    %68 = tpu.iota {dimensions = array<i32: 1>} : vector<4x128xi32>
    %c0_31 = arith.constant 0 : index
    %c0_32 = arith.constant 0 : index
    %69 = vector.load %arg9[%c0_31, %c0_32] : memref<4x1xi32, #tpu.memory_space<vmem>>, vector<4x1xi32>
    %70 = vector.broadcast %69 : vector<4x1xi32> to vector<4x128xi32>
    %71 = arith.cmpi eq, %68, %70 : vector<4x128xi32>
    %cst_33 = arith.constant 0.000000e+00 : f32
    %72 = vector.broadcast %cst_33 : f32 to vector<4x128xf32>
    %73 = arith.select %71, %67, %72 : vector<4x128xi1>, vector<4x128xf32>
    %cst_34 = arith.constant dense<0.000000e+00> : vector<4xf32>
    %74 = vector.multi_reduction <add>, %73, %cst_34 [1] : vector<4x128xf32> to vector<4xf32>
    %75 = vector.shape_cast %74 : vector<4xf32> to vector<4x1xf32>
    %cst_35 = arith.constant dense<0.000000e+00> : vector<1xf32>
    %76 = vector.multi_reduction <add>, %75, %cst_35 [0] : vector<4x1xf32> to vector<1xf32>
    %77 = vector.shape_cast %76 : vector<1xf32> to vector<1x1xf32>
    %cst_36 = arith.constant 0.000000e+00 : f32
    %78 = vector.broadcast %cst_36 : f32 to vector<1x1xf32>
    %79 = arith.subf %78, %77 : vector<1x1xf32>
    %cst_37 = arith.constant 4.000000e+00 : f32
    %80 = vector.broadcast %cst_37 : f32 to vector<1x1xf32>
    %81 = arith.divf %79, %80 : vector<1x1xf32>
    %c0_38 = arith.constant 0 : index
    %c0_39 = arith.constant 0 : index
    %82 = vector.load %arg10[%c0_38, %c0_39] : memref<1x1xf32, #tpu.memory_space<vmem>>, vector<1x1xf32>
    tpu.vector_store %arg10[%c0_38, %c0_39], %81 {strides = array<i32>} : memref<1x1xf32, #tpu.memory_space<vmem>>, vector<1x1xf32>,
    return
  }
}

</mosaic_0001>

<llo_original>
// kernel: dann_head_forward.1
$region0: #{dann_head_forward.1}
  #allocation0 [shape = 'u32[]', space=smem, size = 0x4, offset = 0x4, fixed_abs, tag = 'smem constant byte address 0x4 - core index']
  #allocation1 [shape = 'u32[72,128]{1,0:T(1,128)}', space=vmem, size = 0x9000, scoped, tag = 'internal scratch']
  %s0 = inlined_call_operand.vmem [shape: bf16[800,128], index: 0, kind: input, shape index: {}]
  %s1 = inlined_call_operand.vmem [shape: bf16[128,256], index: 1, kind: input, shape index: {}]
  %s2 = inlined_call_operand.vmem [shape: f32[1,256], index: 2, kind: input, shape index: {}]
  %s3 = inlined_call_operand.vmem [shape: bf16[256,128], index: 3, kind: input, shape index: {}]
  %s4 = inlined_call_operand.vmem [shape: f32[1,128], index: 4, kind: input, shape index: {}]
  %s5 = inlined_call_operand.vmem [shape: f32[1,128], index: 5, kind: input, shape index: {}]
  %s6 = inlined_call_operand.vmem [shape: f32[1,128], index: 6, kind: input, shape index: {}]
  %s7 = inlined_call_operand.vmem [shape: bf16[128,128], index: 7, kind: input, shape index: {}]
  %s8 = inlined_call_operand.vmem [shape: f32[1,128], index: 8, kind: input, shape index: {}]
  %s9 = inlined_call_operand.vmem [shape: s32[4,1], index: 9, kind: input, shape index: {}]
  %s10 = inlined_call_operand.hbm [shape: f32[1,1], index: 10, kind: output, shape index: {}]
  %s11 = sld [smem:[#allocation0]]
  $region50: #{dann_head_forward.1} parent=0
    _
  %s13 = ssub.s32 1, %s11
  %s14 = scalar_select 0, %s13, %s11
  $region1: #{dann_head_forward.1} parent=0
    #allocation2 [shape = 'u8[512]{0}', space=vmem, size = 0x400, scoped, tag = 'output window, operand 0, single buffered']
    #allocation3 [shape = 's32[1]{0}', space=sflag, size = 0x4, scoped, tag = 'scoped memory for dann_head_forward.1']
    %15 = vsyncpa [#allocation3], 0
    // Predicated region
    $region2: #{dann_head_forward.1} parent=1 // pred_check
      _
    $region3: #{dann_head_forward.1} parent=1 // pred_check_branch
      %17 = sbr.rel (0) target = $region5
    $region4: #{dann_head_forward.1} parent=1 // pred_region
      _
    $region5: #{dann_head_forward.1} parent=1 // pred_fallthru
      _
    // Predicated region
    $region6: #{dann_head_forward.1} parent=1 // pred_check
      _
    $region7: #{dann_head_forward.1} parent=1 // pred_check_branch
      %19 = sbr.rel (0) target = $region9
    $region8: #{dann_head_forward.1} parent=1 // pred_region
      _
    $region9: #{dann_head_forward.1} parent=1 // pred_fallthru
      _
    // Predicated region
    $region10: #{dann_head_forward.1} parent=1 // pred_check
      _
    $region11: #{dann_head_forward.1} parent=1 // pred_check_branch
      %21 = sbr.rel (0) target = $region13
    $region12: #{dann_head_forward.1} parent=1 // pred_region
      _
    $region13: #{dann_head_forward.1} parent=1 // pred_fallthru
      _
    // Predicated region
    $region14: #{dann_head_forward.1} parent=1 // pred_check
      _
    $region15: #{dann_head_forward.1} parent=1 // pred_check_branch
      %23 = sbr.rel (0) target = $region17
    $region16: #{dann_head_forward.1} parent=1 // pred_region
      _
    $region17: #{dann_head_forward.1} parent=1 // pred_fallthru
      _
    // Predicated region
    $region18: #{dann_head_forward.1} parent=1 // pred_check
      _
    $region19: #{dann_head_forward.1} parent=1 // pred_check_branch
      %25 = sbr.rel (0) target = $region21
    $region20: #{dann_head_forward.1} parent=1 // pred_region
      _
    $region21: #{dann_head_forward.1} parent=1 // pred_fallthru
      _
    // Predicated region
    $region22: #{dann_head_forward.1} parent=1 // pred_check
      _
    $region23: #{dann_head_forward.1} parent=1 // pred_check_branch
      %27 = sbr.rel (0) target = $region25
    $region24: #{dann_head_forward.1} parent=1 // pred_region
      _
    $region25: #{dann_head_forward.1} parent=1 // pred_fallthru
      _
    // Predicated region
    $region26: #{dann_head_forward.1} parent=1 // pred_check
      _
    $region27: #{dann_head_forward.1} parent=1 // pred_check_branch
      %29 = sbr.rel (0) target = $region29
    $region28: #{dann_head_forward.1} parent=1 // pred_region
      _
    $region29: #{dann_head_forward.1} parent=1 // pred_fallthru
      _
    // Predicated region
    $region30: #{dann_head_forward.1} parent=1 // pred_check
      _
    $region31: #{dann_head_forward.1} parent=1 // pred_check_branch
      %31 = sbr.rel (0) target = $region33
    $region32: #{dann_head_forward.1} parent=1 // pred_region
      _
    $region33: #{dann_head_forward.1} parent=1 // pred_fallthru
      _
    // Predicated region
    $region34: #{dann_head_forward.1} parent=1 // pred_check
      _
    $region35: #{dann_head_forward.1} parent=1 // pred_check_branch
      %33 = sbr.rel (0) target = $region37
    $region36: #{dann_head_forward.1} parent=1 // pred_region
      _
    $region37: #{dann_head_forward.1} parent=1 // pred_fallthru
      _
    // Predicated region
    $region38: #{dann_head_forward.1} parent=1 // pred_check
      _
    $region39: #{dann_head_forward.1} parent=1 // pred_check_branch
      %35 = sbr.rel (0) target = $region41
    $region40: #{dann_head_forward.1} parent=1 // pred_region
      _
    $region41: #{dann_head_forward.1} parent=1 // pred_fallthru
      _
    %v36 = vld [vmem:[%s0] sm:$0xf]
    %v37 = vld [vmem:[%s0 + $0x4] sm:$0xf]
    %v38 = vld [vmem:[%s0 + $0x8] sm:$0xf]
    %v39 = vld [vmem:[%s0 + $0xc] sm:$0xf]
    %v40 = vld [vmem:[%s0 + $0x10] sm:$0xf]
    %v41 = vld [vmem:[%s0 + $0x14] sm:$0xf]
    %v42 = vld [vmem:[%s0 + $0x18] sm:$0xf]
    %v43 = vld [vmem:[%s0 + $0x1c] sm:$0xf]
    %v44 = vld [vmem:[%s0 + $0x20] sm:$0xf]
    %v45 = vld [vmem:[%s0 + $0x24] sm:$0xf]
    %v46 = vld [vmem:[%s0 + $0x28] sm:$0xf]
    %v47 = vld [vmem:[%s0 + $0x2c] sm:$0xf]
    %v48 = vld [vmem:[%s0 + $0x30] sm:$0xf]
    %v49 = vld [vmem:[%s0 + $0x34] sm:$0xf]
    %v50 = vld [vmem:[%s0 + $0x38] sm:$0xf]
    %v51 = vld [vmem:[%s0 + $0x3c] sm:$0xf]
    %v52 = vld [vmem:[%s0 + $0x40] sm:$0xf]
    %v53 = vld [vmem:[%s0 + $0x44] sm:$0xf]
    %v54 = vld [vmem:[%s0 + $0x48] sm:$0xf]
    %v55 = vld [vmem:[%s0 + $0x4c] sm:$0xf]
    %v56 = vld [vmem:[%s0 + $0x50] sm:$0xf]
    %v57 = vld [vmem:[%s0 + $0x54] sm:$0xf]
    %v58 = vld [vmem:[%s0 + $0x58] sm:$0xf]
    %v59 = vld [vmem:[%s0 + $0x5c] sm:$0xf]
    %v60 = vld [vmem:[%s0 + $0x60] sm:$0xf]
    %v61 = vld [vmem:[%s0 + $0x64] sm:$0xf]
    %v62 = vld [vmem:[%s0 + $0x68] sm:$0xf]
    %v63 = vld [vmem:[%s0 + $0x6c] sm:$0xf]
    %v64 = vld [vmem:[%s0 + $0x70] sm:$0xf]
    %v65 = vld [vmem:[%s0 + $0x74] sm:$0xf]
    %v66 = vld [vmem:[%s0 + $0x78] sm:$0xf]
    %v67 = vld [vmem:[%s0 + $0x7c] sm:$0xf]
    %v68 = vld [vmem:[%s0 + $0x80] sm:$0xf]
    %v69 = vld [vmem:[%s0 + $0x84] sm:$0xf]
    %v70 = vld [vmem:[%s0 + $0x88] sm:$0xf]
    %v71 = vld [vmem:[%s0 + $0x8c] sm:$0xf]
    %v72 = vld [vmem:[%s0 + $0x90] sm:$0xf]
    %v73 = vld [vmem:[%s0 + $0x94] sm:$0xf]
    %v74 = vld [vmem:[%s0 + $0x98] sm:$0xf]
    %v75 = vld [vmem:[%s0 + $0x9c] sm:$0xf]
    %v76 = vld [vmem:[%s0 + $0xa0] sm:$0xf]
    %v77 = vld [vmem:[%s0 + $0xa4] sm:$0xf]
    %v78 = vld [vmem:[%s0 + $0xa8] sm:$0xf]
    %v79 = vld [vmem:[%s0 + $0xac] sm:$0xf]
    %v80 = vld [vmem:[%s0 + $0xb0] sm:$0xf]
    %v81 = vld [vmem:[%s0 + $0xb4] sm:$0xf]
    %v82 = vld [vmem:[%s0 + $0xb8] sm:$0xf]
    %v83 = vld [vmem:[%s0 + $0xbc] sm:$0xf]
    %v84 = vld [vmem:[%s0 + $0xc0] sm:$0xf]
    %v85 = vld [vmem:[%s0 + $0xc4] sm:$0xf]
    %v86 = vld [vmem:[%s0 + $0xc8] sm:$0xf]
    %v87 = vld [vmem:[%s0 + $0xcc] sm:$0xf]
    %v88 = vld [vmem:[%s0 + $0xd0] sm:$0xf]
    %v89 = vld [vmem:[%s0 + $0xd4] sm:$0xf]
    %v90 = vld [vmem:[%s0 + $0xd8] sm:$0xf]
    %v91 = vld [vmem:[%s0 + $0xdc] sm:$0xf]
    %v92 = vld [vmem:[%s0 + $0xe0] sm:$0xf]
    %v93 = vld [vmem:[%s0 + $0xe4] sm:$0xf]
    %v94 = vld [vmem:[%s0 + $0xe8] sm:$0xf]
    %v95 = vld [vmem:[%s0 + $0xec] sm:$0xf]
    %v96 = vld [vmem:[%s0 + $0xf0] sm:$0xf]
    %v97 = vld [vmem:[%s0 + $0xf4] sm:$0xf]
    %v98 = vld [vmem:[%s0 + $0xf8] sm:$0xf]
    %v99 = vld [vmem:[%s0 + $0xfc] sm:$0xf]
    %v100 = vld [vmem:[%s0 + $0x100] sm:$0xf]
    %v101 = vld [vmem:[%s0 + $0x104] sm:$0xf]
    %v102 = vld [vmem:[%s0 + $0x108] sm:$0xf]
    %v103 = vld [vmem:[%s0 + $0x10c] sm:$0xf]
    %v104 = vld [vmem:[%s0 + $0x110] sm:$0xf]
    %v105 = vld [vmem:[%s0 + $0x114] sm:$0xf]
    %v106 = vld [vmem:[%s0 + $0x118] sm:$0xf]
    %v107 = vld [vmem:[%s0 + $0x11c] sm:$0xf]
    %v108 = vld [vmem:[%s0 + $0x120] sm:$0xf]
    %v109 = vld [vmem:[%s0 + $0x124] sm:$0xf]
    %v110 = vld [vmem:[%s0 + $0x128] sm:$0xf]
    %v111 = vld [vmem:[%s0 + $0x12c] sm:$0xf]
    %v112 = vld [vmem:[%s0 + $0x130] sm:$0xf]
    %v113 = vld [vmem:[%s0 + $0x134] sm:$0xf]
    %v114 = vld [vmem:[%s0 + $0x138] sm:$0xf]
    %v115 = vld [vmem:[%s0 + $0x13c] sm:$0xf]
    %v116 = vld [vmem:[%s0 + $0x140] sm:$0xf]
    %v117 = vld [vmem:[%s0 + $0x144] sm:$0xf]
    %v118 = vld [vmem:[%s0 + $0x148] sm:$0xf]
    %v119 = vld [vmem:[%s0 + $0x14c] sm:$0xf]
    %v120 = vld [vmem:[%s0 + $0x150] sm:$0xf]
    %v121 = vld [vmem:[%s0 + $0x154] sm:$0xf]
    %v122 = vld [vmem:[%s0 + $0x158] sm:$0xf]
    %v123 = vld [vmem:[%s0 + $0x15c] sm:$0xf]
    %v124 = vld [vmem:[%s0 + $0x160] sm:$0xf]
    %v125 = vld [vmem:[%s0 + $0x164] sm:$0xf]
    %v126 = vld [vmem:[%s0 + $0x168] sm:$0xf]
    %v127 = vld [vmem:[%s0 + $0x16c] sm:$0xf]
    %v128 = vld [vmem:[%s0 + $0x170] sm:$0xf]
    %v129 = vld [vmem:[%s0 + $0x174] sm:$0xf]
    %v130 = vld [vmem:[%s0 + $0x178] sm:$0xf]
    %v131 = vld [vmem:[%s0 + $0x17c] sm:$0xf]
    %v132 = vld [vmem:[%s0 + $0x180] sm:$0xf]
    %v133 = vld [vmem:[%s0 + $0x184] sm:$0xf]
    %v134 = vld [vmem:[%s0 + $0x188] sm:$0xf]
    %v135 = vld [vmem:[%s0 + $0x18c] sm:$0xf]
    %v136 = vld [vmem:[%s1] sm:$0xff]
    %v137 = vld [vmem:[%s1 + $0x8] sm:$0xff]
    %v138 = vld [vmem:[%s1 + $0x10] sm:$0xff]
    %v139 = vld [vmem:[%s1 + $0x18] sm:$0xff]
    %v140 = vld [vmem:[%s1 + $0x20] sm:$0xff]
    %v141 = vld [vmem:[%s1 + $0x28] sm:$0xff]
    %v142 = vld [vmem:[%s1 + $0x30] sm:$0xff]
    %v143 = vld [vmem:[%s1 + $0x38] sm:$0xff]
    %v144 = vld [vmem:[%s1 + $0x40] sm:$0xff]
    %v145 = vld [vmem:[%s1 + $0x48] sm:$0xff]
    %v146 = vld [vmem:[%s1 + $0x50] sm:$0xff]
    %v147 = vld [vmem:[%s1 + $0x58] sm:$0xff]
    %v148 = vld [vmem:[%s1 + $0x60] sm:$0xff]
    %v149 = vld [vmem:[%s1 + $0x68] sm:$0xff]
    %v150 = vld [vmem:[%s1 + $0x70] sm:$0xff]
    %v151 = vld [vmem:[%s1 + $0x78] sm:$0xff]
    %v252 = vunpack.c.l.b16 %v36
    %v253 = vunpack.c.l.b16 %v37
    %v254 = vunpack.c.l.b16 %v38
    %v255 = vunpack.c.l.b16 %v39
    %v256 = vunpack.c.l.b16 %v40
    %v257 = vunpack.c.l.b16 %v41
    %v258 = vunpack.c.l.b16 %v42
    %v259 = vunpack.c.l.b16 %v43
    %v260 = vunpack.c.l.b16 %v44
    %v261 = vunpack.c.l.b16 %v45
    %v262 = vunpack.c.l.b16 %v46
    %v263 = vunpack.c.l.b16 %v47
    %v264 = vunpack.c.l.b16 %v48
    %v265 = vunpack.c.l.b16 %v49
    %v266 = vunpack.c.l.b16 %v50
    %v267 = vunpack.c.l.b16 %v51
    %v268 = vunpack.c.l.b16 %v52
    %v269 = vunpack.c.l.b16 %v53
    %v270 = vunpack.c.l.b16 %v54
    %v271 = vunpack.c.l.b16 %v55
    %v272 = vunpack.c.l.b16 %v56
    %v273 = vunpack.c.l.b16 %v57
    %v274 = vunpack.c.l.b16 %v58
    %v275 = vunpack.c.l.b16 %v59
    %v276 = vunpack.c.l.b16 %v60
    %v277 = vunpack.c.l.b16 %v61
    %v278 = vunpack.c.l.b16 %v62
    %v279 = vunpack.c.l.b16 %v63
    %v280 = vunpack.c.l.b16 %v64
    %v281 = vunpack.c.l.b16 %v65
    %v282 = vunpack.c.l.b16 %v66
    %v283 = vunpack.c.l.b16 %v67
    %v284 = vunpack.c.l.b16 %v68
    %v285 = vunpack.c.l.b16 %v69
    %v286 = vunpack.c.l.b16 %v70
    %v287 = vunpack.c.l.b16 %v71
    %v288 = vunpack.c.l.b16 %v72
    %v289 = vunpack.c.l.b16 %v73
    %v290 = vunpack.c.l.b16 %v74
    %v291 = vunpack.c.l.b16 %v75
    %v292 = vunpack.c.l.b16 %v76
    %v293 = vunpack.c.l.b16 %v77
    %v294 = vunpack.c.l.b16 %v78
    %v295 = vunpack.c.l.b16 %v79
    %v296 = vunpack.c.l.b16 %v80
    %v297 = vunpack.c.l.b16 %v81
    %v298 = vunpack.c.l.b16 %v82
    %v299 = vunpack.c.l.b16 %v83
    %v300 = vunpack.c.l.b16 %v84
    %v301 = vunpack.c.l.b16 %v85
    %v302 = vunpack.c.l.b16 %v86
    %v303 = vunpack.c.l.b16 %v87
    %v304 = vunpack.c.l.b16 %v88
    %v305 = vunpack.c.l.b16 %v89
    %v306 = vunpack.c.l.b16 %v90
    %v307 = vunpack.c.l.b16 %v91
    %v308 = vunpack.c.l.b16 %v92
    %v309 = vunpack.c.l.b16 %v93
    %v310 = vunpack.c.l.b16 %v94
    %v311 = vunpack.c.l.b16 %v95
    %v312 = vunpack.c.l.b16 %v96
    %v313 = vunpack.c.l.b16 %v97
    %v314 = vunpack.c.l.b16 %v98
    %v315 = vunpack.c.l.b16 %v99
    %v316 = vunpack.c.l.b16 %v100
    %v317 = vunpack.c.l.b16 %v101
    %v318 = vunpack.c.l.b16 %v102
    %v319 = vunpack.c.l.b16 %v103
    %v320 = vunpack.c.l.b16 %v104
    %v321 = vunpack.c.l.b16 %v105
    %v322 = vunpack.c.l.b16 %v106
    %v323 = vunpack.c.l.b16 %v107
    %v324 = vunpack.c.l.b16 %v108
    %v325 = vunpack.c.l.b16 %v109
    %v326 = vunpack.c.l.b16 %v110
    %v327 = vunpack.c.l.b16 %v111
    %v328 = vunpack.c.l.b16 %v112
    %v329 = vunpack.c.l.b16 %v113
    %v330 = vunpack.c.l.b16 %v114
    %v331 = vunpack.c.l.b16 %v115
    %v332 = vunpack.c.l.b16 %v116
    %v333 = vunpack.c.l.b16 %v117
    %v334 = vunpack.c.l.b16 %v118
    %v335 = vunpack.c.l.b16 %v119
    %v336 = vunpack.c.l.b16 %v120
    %v337 = vunpack.c.l.b16 %v121
    %v338 = vunpack.c.l.b16 %v122
    %v339 = vunpack.c.l.b16 %v123
    %v340 = vunpack.c.l.b16 %v124
    %v341 = vunpack.c.l.b16 %v125
    %v342 = vunpack.c.l.b16 %v126
    %v343 = vunpack.c.l.b16 %v127
    %v344 = vunpack.c.l.b16 %v128
    %v345 = vunpack.c.l.b16 %v129
    %v346 = vunpack.c.l.b16 %v130
    %v347 = vunpack.c.l.b16 %v131
    %v348 = vunpack.c.l.b16 %v132
    %v349 = vunpack.c.l.b16 %v133
    %v350 = vunpack.c.l.b16 %v134
    %v351 = vunpack.c.l.b16 %v135
    %v352 = vpack.c.b16 %v253, %v252
    %v353 = vpack.c.b16 %v255, %v254
    %v354 = vpack.c.b16 %v257, %v256
    %v355 = vpack.c.b16 %v259, %v258
    %v356 = vpack.c.b16 %v261, %v260
    %v357 = vpack.c.b16 %v263, %v262
    %v358 = vpack.c.b16 %v265, %v264
    %v359 = vpack.c.b16 %v267, %v266
    %v360 = vpack.c.b16 %v269, %v268
    %v361 = vpack.c.b16 %v271, %v270
    %v362 = vpack.c.b16 %v273, %v272
    %v363 = vpack.c.b16 %v275, %v274
    %v364 = vpack.c.b16 %v277, %v276
    %v365 = vpack.c.b16 %v279, %v278
    %v366 = vpack.c.b16 %v281, %v280
    %v367 = vpack.c.b16 %v283, %v282
    %v368 = vpack.c.b16 %v285, %v284
    %v369 = vpack.c.b16 %v287, %v286
    %v370 = vpack.c.b16 %v289, %v288
    %v371 = vpack.c.b16 %v291, %v290
    %v372 = vpack.c.b16 %v293, %v292
    %v373 = vpack.c.b16 %v295, %v294
    %v374 = vpack.c.b16 %v297, %v296
    %v375 = vpack.c.b16 %v299, %v298
    %v376 = vpack.c.b16 %v301, %v300
    %v377 = vpack.c.b16 %v303, %v302
    %v378 = vpack.c.b16 %v305, %v304
    %v379 = vpack.c.b16 %v307, %v306
    %v380 = vpack.c.b16 %v309, %v308
    %v381 = vpack.c.b16 %v311, %v310
    %v382 = vpack.c.b16 %v313, %v312
    %v383 = vpack.c.b16 %v315, %v314
    %v384 = vpack.c.b16 %v317, %v316
    %v385 = vpack.c.b16 %v319, %v318
    %v386 = vpack.c.b16 %v321, %v320
    %v387 = vpack.c.b16 %v323, %v322
    %v388 = vpack.c.b16 %v325, %v324
    %v389 = vpack.c.b16 %v327, %v326
    %v390 = vpack.c.b16 %v329, %v328
    %v391 = vpack.c.b16 %v331, %v330
    %v392 = vpack.c.b16 %v333, %v332
    %v393 = vpack.c.b16 %v335, %v334
    %v394 = vpack.c.b16 %v337, %v336
    %v395 = vpack.c.b16 %v339, %v338
    %v396 = vpack.c.b16 %v341, %v340
    %v397 = vpack.c.b16 %v343, %v342
    %v398 = vpack.c.b16 %v345, %v344
    %v399 = vpack.c.b16 %v347, %v346
    %v400 = vpack.c.b16 %v349, %v348
    %v401 = vpack.c.b16 %v351, %v350
    %v468 = vunpack.c.l.b16 %v136
    %v469 = vunpack.c.h.b16 %v136
    %v470 = vunpack.c.l.b16 %v137
    %v471 = vunpack.c.h.b16 %v137
    %v472 = vunpack.c.l.b16 %v138
    %v473 = vunpack.c.h.b16 %v138
    %v474 = vunpack.c.l.b16 %v139
    %v475 = vunpack.c.h.b16 %v139
    %v476 = vunpack.c.l.b16 %v140
    %v477 = vunpack.c.h.b16 %v140
    %v478 = vunpack.c.l.b16 %v141
    %v479 = vunpack.c.h.b16 %v141
    %v480 = vunpack.c.l.b16 %v142
    %v481 = vunpack.c.h.b16 %v142
    %v482 = vunpack.c.l.b16 %v143
    %v483 = vunpack.c.h.b16 %v143
    %v484 = vunpack.c.l.b16 %v144
    %v485 = vunpack.c.h.b16 %v144
    %v486 = vunpack.c.l.b16 %v145
    %v487 = vunpack.c.h.b16 %v145
    %v488 = vunpack.c.l.b16 %v146
    %v489 = vunpack.c.h.b16 %v146
    %v490 = vunpack.c.l.b16 %v147
    %v491 = vunpack.c.h.b16 %v147
    %v492 = vunpack.c.l.b16 %v148
    %v493 = vunpack.c.h.b16 %v148
    %v494 = vunpack.c.l.b16 %v149
    %v495 = vunpack.c.h.b16 %v149
    %v496 = vunpack.c.l.b16 %v150
    %v497 = vunpack.c.h.b16 %v150
    %v498 = vunpack.c.l.b16 %v151
    %v499 = vunpack.c.h.b16 %v151
    %v500 = vpack.c.b16 %v470, %v468
    %v501 = vpack.c.b16 %v471, %v469
    %v502 = vpack.c.b16 %v474, %v472
    %v503 = vpack.c.b16 %v475, %v473
    %v504 = vpack.c.b16 %v478, %v476
    %v505 = vpack.c.b16 %v479, %v477
    %v506 = vpack.c.b16 %v482, %v480
    %v507 = vpack.c.b16 %v483, %v481
    %v508 = vpack.c.b16 %v486, %v484
    %v509 = vpack.c.b16 %v487, %v485
    %v510 = vpack.c.b16 %v490, %v488
    %v511 = vpack.c.b16 %v491, %v489
    %v512 = vpack.c.b16 %v494, %v492
    %v513 = vpack.c.b16 %v495, %v493
    %v514 = vpack.c.b16 %v498, %v496
    %v515 = vpack.c.b16 %v499, %v497
    %532 = vmatpush.bf16.msra.mxu0 %v514
    %533 = vmatpush.bf16.msra.mxu0 %v512
    %534 = vmatpush.bf16.msra.mxu0 %v510
    %535 = vmatpush.bf16.msra.mxu0 %v508
    %536 = vmatpush.bf16.msra.mxu0 %v506
    %537 = vmatpush.bf16.msra.mxu0 %v504
    %538 = vmatpush.bf16.msra.mxu0 %v502
    %539 = vmatpush.bf16.msra.mxu0 %v500
    %540 = vmatmul.bf16.gmra.mxu0 %v352
    %v541 = vpop.f32.mrf.mxu0
    %v542 = vadd.f32 0.0, %v541
    %v543 = vpop.f32.mrf.mxu0
    %v544 = vadd.f32 0.0, %v543
    %545 = vmatmul.bf16.gmra.mxu0 %v353
    %v546 = vpop.f32.mrf.mxu0
    %v547 = vadd.f32 0.0, %v546
    %v548 = vpop.f32.mrf.mxu0
    %v549 = vadd.f32 0.0, %v548
    %550 = vmatmul.bf16.gmra.mxu0 %v354
    %v551 = vpop.f32.mrf.mxu0
    %v552 = vadd.f32 0.0, %v551
    %v553 = vpop.f32.mrf.mxu0
    %v554 = vadd.f32 0.0, %v553
    %555 = vmatmul.bf16.gmra.mxu0 %v355
    %v556 = vpop.f32.mrf.mxu0
    %v557 = vadd.f32 0.0, %v556
    %v558 = vpop.f32.mrf.mxu0
    %v559 = vadd.f32 0.0, %v558
    %560 = vmatmul.bf16.gmra.mxu0 %v356
    %v561 = vpop.f32.mrf.mxu0
    %v562 = vadd.f32 0.0, %v561
    %v563 = vpop.f32.mrf.mxu0
    %v564 = vadd.f32 0.0, %v563
    %565 = vmatmul.bf16.gmra.mxu0 %v357
    %v566 = vpop.f32.mrf.mxu0
    %v567 = vadd.f32 0.0, %v566
    %v568 = vpop.f32.mrf.mxu0
    %v569 = vadd.f32 0.0, %v568
    %570 = vmatmul.bf16.gmra.mxu0 %v358
    %v571 = vpop.f32.mrf.mxu0
    %v572 = vadd.f32 0.0, %v571
    %v573 = vpop.f32.mrf.mxu0
    %v574 = vadd.f32 0.0, %v573
    %575 = vmatmul.bf16.gmra.mxu0 %v359
    %v576 = vpop.f32.mrf.mxu0
    %v577 = vadd.f32 0.0, %v576
    %v578 = vpop.f32.mrf.mxu0
    %v579 = vadd.f32 0.0, %v578
    %580 = vmatmul.bf16.gmra.mxu0 %v360
    %v581 = vpop.f32.mrf.mxu0
    %v582 = vadd.f32 0.0, %v581
    %v583 = vpop.f32.mrf.mxu0
    %v584 = vadd.f32 0.0, %v583
    %585 = vmatmul.bf16.gmra.mxu0 %v361
    %v586 = vpop.f32.mrf.mxu0
    %v587 = vadd.f32 0.0, %v586
    %v588 = vpop.f32.mrf.mxu0
    %v589 = vadd.f32 0.0, %v588
    %590 = vmatmul.bf16.gmra.mxu0 %v362
    %v591 = vpop.f32.mrf.mxu0
    %v592 = vadd.f32 0.0, %v591
    %v593 = vpop.f32.mrf.mxu0
    %v594 = vadd.f32 0.0, %v593
    %595 = vmatmul.bf16.gmra.mxu0 %v363
    %v596 = vpop.f32.mrf.mxu0
    %v597 = vadd.f32 0.0, %v596
    %v598 = vpop.f32.mrf.mxu0
    %v599 = vadd.f32 0.0, %v598
    %600 = vmatmul.bf16.gmra.mxu0 %v364
    %v601 = vpop.f32.mrf.mxu0
    %v602 = vadd.f32 0.0, %v601
    %v603 = vpop.f32.mrf.mxu0
    %v604 = vadd.f32 0.0, %v603
    %605 = vmatmul.bf16.gmra.mxu0 %v365
    %v606 = vpop.f32.mrf.mxu0
    %v607 = vadd.f32 0.0, %v606
    %v608 = vpop.f32.mrf.mxu0
    %v609 = vadd.f32 0.0, %v608
    %610 = vmatmul.bf16.gmra.mxu0 %v366
    %v611 = vpop.f32.mrf.mxu0
    %v612 = vadd.f32 0.0, %v611
    %v613 = vpop.f32.mrf.mxu0
    %v614 = vadd.f32 0.0, %v613
    %615 = vmatmul.bf16.gmra.mxu0 %v367
    %v616 = vpop.f32.mrf.mxu0
    %v617 = vadd.f32 0.0, %v616
    %v618 = vpop.f32.mrf.mxu0
    %v619 = vadd.f32 0.0, %v618
    %620 = vmatmul.bf16.gmra.mxu0 %v368
    %v621 = vpop.f32.mrf.mxu0
    %v622 = vadd.f32 0.0, %v621
    %v623 = vpop.f32.mrf.mxu0
    %v624 = vadd.f32 0.0, %v623
    %625 = vmatmul.bf16.gmra.mxu0 %v369
    %v626 = vpop.f32.mrf.mxu0
    %v627 = vadd.f32 0.0, %v626
    %v628 = vpop.f32.mrf.mxu0
    %v629 = vadd.f32 0.0, %v628
    %630 = vmatmul.bf16.gmra.mxu0 %v370
    %v631 = vpop.f32.mrf.mxu0
    %v632 = vadd.f32 0.0, %v631
    %v633 = vpop.f32.mrf.mxu0
    %v634 = vadd.f32 0.0, %v633
    %635 = vmatmul.bf16.gmra.mxu0 %v371
    %v636 = vpop.f32.mrf.mxu0
    %v637 = vadd.f32 0.0, %v636
    %v638 = vpop.f32.mrf.mxu0
    %v639 = vadd.f32 0.0, %v638
    %640 = vmatmul.bf16.gmra.mxu0 %v372
    %v641 = vpop.f32.mrf.mxu0
    %v642 = vadd.f32 0.0, %v641
    %v643 = vpop.f32.mrf.mxu0
    %v644 = vadd.f32 0.0, %v643
    %645 = vmatmul.bf16.gmra.mxu0 %v373
    %v646 = vpop.f32.mrf.mxu0
    %v647 = vadd.f32 0.0, %v646
    %v648 = vpop.f32.mrf.mxu0
    %v649 = vadd.f32 0.0, %v648
    %650 = vmatmul.bf16.gmra.mxu0 %v374
    %v651 = vpop.f32.mrf.mxu0
    %v652 = vadd.f32 0.0, %v651
    %v653 = vpop.f32.mrf.mxu0
    %v654 = vadd.f32 0.0, %v653
    %655 = vmatmul.bf16.gmra.mxu0 %v375
    %v656 = vpop.f32.mrf.mxu0
    %v657 = vadd.f32 0.0, %v656
    %v658 = vpop.f32.mrf.mxu0
    %v659 = vadd.f32 0.0, %v658
    %660 = vmatmul.bf16.gmra.mxu0 %v376
    %v661 = vpop.f32.mrf.mxu0
    %v662 = vadd.f32 0.0, %v661
    %v663 = vpop.f32.mrf.mxu0
    %v664 = vadd.f32 0.0, %v663
    %665 = vmatmul.bf16.gmra.mxu0 %v377
    %v666 = vpop.f32.mrf.mxu0
    %v667 = vadd.f32 0.0, %v666
    %v668 = vpop.f32.mrf.mxu0
    %v669 = vadd.f32 0.0, %v668
    %670 = vmatmul.bf16.gmra.mxu0 %v378
    %v671 = vpop.f32.mrf.mxu0
    %v672 = vadd.f32 0.0, %v671
    %v673 = vpop.f32.mrf.mxu0
    %v674 = vadd.f32 0.0, %v673
    %675 = vmatmul.bf16.gmra.mxu0 %v379
    %v676 = vpop.f32.mrf.mxu0
    %v677 = vadd.f32 0.0, %v676
    %v678 = vpop.f32.mrf.mxu0
    %v679 = vadd.f32 0.0, %v678
    %680 = vmatmul.bf16.gmra.mxu0 %v380
    %v681 = vpop.f32.mrf.mxu0
    %v682 = vadd.f32 0.0, %v681
    %v683 = vpop.f32.mrf.mxu0
    %v684 = vadd.f32 0.0, %v683
    %685 = vmatmul.bf16.gmra.mxu0 %v381
    %v686 = vpop.f32.mrf.mxu0
    %v687 = vadd.f32 0.0, %v686
    %v688 = vpop.f32.mrf.mxu0
    %v689 = vadd.f32 0.0, %v688
    %690 = vmatmul.bf16.gmra.mxu0 %v382
    %v691 = vpop.f32.mrf.mxu0
    %v692 = vadd.f32 0.0, %v691
    %v693 = vpop.f32.mrf.mxu0
    %v694 = vadd.f32 0.0, %v693
    %695 = vmatmul.bf16.gmra.mxu0 %v383
    %v696 = vpop.f32.mrf.mxu0
    %v697 = vadd.f32 0.0, %v696
    %v698 = vpop.f32.mrf.mxu0
    %v699 = vadd.f32 0.0, %v698
    %700 = vmatmul.bf16.gmra.mxu0 %v384
    %v701 = vpop.f32.mrf.mxu0
    %v702 = vadd.f32 0.0, %v701
    %v703 = vpop.f32.mrf.mxu0
    %v704 = vadd.f32 0.0, %v703
    %705 = vmatmul.bf16.gmra.mxu0 %v385
    %v706 = vpop.f32.mrf.mxu0
    %v707 = vadd.f32 0.0, %v706
    %v708 = vpop.f32.mrf.mxu0
    %v709 = vadd.f32 0.0, %v708
    %710 = vmatmul.bf16.gmra.mxu0 %v386
    %v711 = vpop.f32.mrf.mxu0
    %v712 = vadd.f32 0.0, %v711
    %v713 = vpop.f32.mrf.mxu0
    %v714 = vadd.f32 0.0, %v713
    %715 = vmatmul.bf16.gmra.mxu0 %v387
    %v716 = vpop.f32.mrf.mxu0
    %v717 = vadd.f32 0.0, %v716
    %v718 = vpop.f32.mrf.mxu0
    %v719 = vadd.f32 0.0, %v718
    %720 = vmatmul.bf16.gmra.mxu0 %v388
    %v721 = vpop.f32.mrf.mxu0
    %v722 = vadd.f32 0.0, %v721
    %v723 = vpop.f32.mrf.mxu0
    %v724 = vadd.f32 0.0, %v723
    %725 = vmatmul.bf16.gmra.mxu0 %v389
    %v726 = vpop.f32.mrf.mxu0
    %v727 = vadd.f32 0.0, %v726
    %v728 = vpop.f32.mrf.mxu0
    %v729 = vadd.f32 0.0, %v728
    %730 = vmatmul.bf16.gmra.mxu0 %v390
    %v731 = vpop.f32.mrf.mxu0
    %v732 = vadd.f32 0.0, %v731
    %v733 = vpop.f32.mrf.mxu0
    %v734 = vadd.f32 0.0, %v733
    %735 = vmatmul.bf16.gmra.mxu0 %v391
    %v736 = vpop.f32.mrf.mxu0
    %v737 = vadd.f32 0.0, %v736
    %v738 = vpop.f32.mrf.mxu0
    %v739 = vadd.f32 0.0, %v738
    %740 = vmatmul.bf16.gmra.mxu0 %v392
    %v741 = vpop.f32.mrf.mxu0
    %v742 = vadd.f32 0.0, %v741
    %v743 = vpop.f32.mrf.mxu0
    %v744 = vadd.f32 0.0, %v743
    %745 = vmatmul.bf16.gmra.mxu0 %v393
    %v746 = vpop.f32.mrf.mxu0
    %v747 = vadd.f32 0.0, %v746
    %v748 = vpop.f32.mrf.mxu0
    %v749 = vadd.f32 0.0, %v748
    %750 = vmatmul.bf16.gmra.mxu0 %v394
    %v751 = vpop.f32.mrf.mxu0
    %v752 = vadd.f32 0.0, %v751
    %v753 = vpop.f32.mrf.mxu0
    %v754 = vadd.f32 0.0, %v753
    %755 = vmatmul.bf16.gmra.mxu0 %v395
    %v756 = vpop.f32.mrf.mxu0
    %v757 = vadd.f32 0.0, %v756
    %v758 = vpop.f32.mrf.mxu0
    %v759 = vadd.f32 0.0, %v758
    %760 = vmatmul.bf16.gmra.mxu0 %v396
    %v761 = vpop.f32.mrf.mxu0
    %v762 = vadd.f32 0.0, %v761
    %v763 = vpop.f32.mrf.mxu0
    %v764 = vadd.f32 0.0, %v763
    %765 = vmatmul.bf16.gmra.mxu0 %v397
    %v766 = vpop.f32.mrf.mxu0
    %v767 = vadd.f32 0.0, %v766
    %v768 = vpop.f32.mrf.mxu0
    %v769 = vadd.f32 0.0, %v768
    %770 = vmatmul.bf16.gmra.mxu0 %v398
    %v771 = vpop.f32.mrf.mxu0
    %v772 = vadd.f32 0.0, %v771
    %v773 = vpop.f32.mrf.mxu0
    %v774 = vadd.f32 0.0, %v773
    %775 = vmatmul.bf16.gmra.mxu0 %v399
    %v776 = vpop.f32.mrf.mxu0
    %v777 = vadd.f32 0.0, %v776
    %v778 = vpop.f32.mrf.mxu0
    %v779 = vadd.f32 0.0, %v778
    %780 = vmatmul.bf16.gmra.mxu0 %v400
    %v781 = vpop.f32.mrf.mxu0
    %v782 = vadd.f32 0.0, %v781
    %v783 = vpop.f32.mrf.mxu0
    %v784 = vadd.f32 0.0, %v783
    %785 = vmatmul.bf16.gmra.mxu0 %v401
    %v786 = vpop.f32.mrf.mxu0
    %v787 = vadd.f32 0.0, %v786
    %v788 = vpop.f32.mrf.mxu0
    %v789 = vadd.f32 0.0, %v788
    %790 = vdwg.mxu0
    %791 = vmatpush.bf16.msra.mxu0 %v515
    %792 = vmatpush.bf16.msra.mxu0 %v513
    %793 = vmatpush.bf16.msra.mxu0 %v511
    %794 = vmatpush.bf16.msra.mxu0 %v509
    %795 = vmatpush.bf16.msra.mxu0 %v507
    %796 = vmatpush.bf16.msra.mxu0 %v505
    %797 = vmatpush.bf16.msra.mxu0 %v503
    %798 = vmatpush.bf16.msra.mxu0 %v501
    %799 = vmatmul.bf16.gmra.mxu0 %v352
    %v800 = vpop.f32.mrf.mxu0
    %v801 = vadd.f32 0.0, %v800
    %v802 = vpop.f32.mrf.mxu0
    %v803 = vadd.f32 0.0, %v802
    %804 = vmatmul.bf16.gmra.mxu0 %v353
    %v805 = vpop.f32.mrf.mxu0
    %v806 = vadd.f32 0.0, %v805
    %v807 = vpop.f32.mrf.mxu0
    %v808 = vadd.f32 0.0, %v807
    %809 = vmatmul.bf16.gmra.mxu0 %v354
    %v810 = vpop.f32.mrf.mxu0
    %v811 = vadd.f32 0.0, %v810
    %v812 = vpop.f32.mrf.mxu0
    %v813 = vadd.f32 0.0, %v812
    %814 = vmatmul.bf16.gmra.mxu0 %v355
    %v815 = vpop.f32.mrf.mxu0
    %v816 = vadd.f32 0.0, %v815
    %v817 = vpop.f32.mrf.mxu0
    %v818 = vadd.f32 0.0, %v817
    %819 = vmatmul.bf16.gmra.mxu0 %v356
    %v820 = vpop.f32.mrf.mxu0
    %v821 = vadd.f32 0.0, %v820
    %v822 = vpop.f32.mrf.mxu0
    %v823 = vadd.f32 0.0, %v822
    %824 = vmatmul.bf16.gmra.mxu0 %v357
    %v825 = vpop.f32.mrf.mxu0
    %v826 = vadd.f32 0.0, %v825
    %v827 = vpop.f32.mrf.mxu0
    %v828 = vadd.f32 0.0, %v827
    %829 = vmatmul.bf16.gmra.mxu0 %v358
    %v830 = vpop.f32.mrf.mxu0
    %v831 = vadd.f32 0.0, %v830
    %v832 = vpop.f32.mrf.mxu0
    %v833 = vadd.f32 0.0, %v832
    %834 = vmatmul.bf16.gmra.mxu0 %v359
    %v835 = vpop.f32.mrf.mxu0
    %v836 = vadd.f32 0.0, %v835
    %v837 = vpop.f32.mrf.mxu0
    %v838 = vadd.f32 0.0, %v837
    %839 = vmatmul.bf16.gmra.mxu0 %v360
    %v840 = vpop.f32.mrf.mxu0
    %v841 = vadd.f32 0.0, %v840
    %v842 = vpop.f32.mrf.mxu0
    %v843 = vadd.f32 0.0, %v842
    %844 = vmatmul.bf16.gmra.mxu0 %v361
    %v845 = vpop.f32.mrf.mxu0
    %v846 = vadd.f32 0.0, %v845
    %v847 = vpop.f32.mrf.mxu0
    %v848 = vadd.f32 0.0, %v847
    %849 = vmatmul.bf16.gmra.mxu0 %v362
    %v850 = vpop.f32.mrf.mxu0
    %v851 = vadd.f32 0.0, %v850
    %v852 = vpop.f32.mrf.mxu0
    %v853 = vadd.f32 0.0, %v852
    %854 = vmatmul.bf16.gmra.mxu0 %v363
    %v855 = vpop.f32.mrf.mxu0
    %v856 = vadd.f32 0.0, %v855
    %v857 = vpop.f32.mrf.mxu0
    %v858 = vadd.f32 0.0, %v857
    %859 = vmatmul.bf16.gmra.mxu0 %v364
    %v860 = vpop.f32.mrf.mxu0
    %v861 = vadd.f32 0.0, %v860
    %v862 = vpop.f32.mrf.mxu0
    %v863 = vadd.f32 0.0, %v862
    %864 = vmatmul.bf16.gmra.mxu0 %v365
    %v865 = vpop.f32.mrf.mxu0
    %v866 = vadd.f32 0.0, %v865
    %v867 = vpop.f32.mrf.mxu0
    %v868 = vadd.f32 0.0, %v867
    %869 = vmatmul.bf16.gmra.mxu0 %v366
    %v870 = vpop.f32.mrf.mxu0
    %v871 = vadd.f32 0.0, %v870
    %v872 = vpop.f32.mrf.mxu0
    %v873 = vadd.f32 0.0, %v872
    %874 = vmatmul.bf16.gmra.mxu0 %v367
    %v875 = vpop.f32.mrf.mxu0
    %v876 = vadd.f32 0.0, %v875
    %v877 = vpop.f32.mrf.mxu0
    %v878 = vadd.f32 0.0, %v877
    %879 = vmatmul.bf16.gmra.mxu0 %v368
    %v880 = vpop.f32.mrf.mxu0
    %v881 = vadd.f32 0.0, %v880
    %v882 = vpop.f32.mrf.mxu0
    %v883 = vadd.f32 0.0, %v882
    %884 = vmatmul.bf16.gmra.mxu0 %v369
    %v885 = vpop.f32.mrf.mxu0
    %v886 = vadd.f32 0.0, %v885
    %v887 = vpop.f32.mrf.mxu0
    %v888 = vadd.f32 0.0, %v887
    %889 = vmatmul.bf16.gmra.mxu0 %v370
    %v890 = vpop.f32.mrf.mxu0
    %v891 = vadd.f32 0.0, %v890
    %v892 = vpop.f32.mrf.mxu0
    %v893 = vadd.f32 0.0, %v892
    %894 = vmatmul.bf16.gmra.mxu0 %v371
    %v895 = vpop.f32.mrf.mxu0
    %v896 = vadd.f32 0.0, %v895
    %v897 = vpop.f32.mrf.mxu0
    %v898 = vadd.f32 0.0, %v897
    %899 = vmatmul.bf16.gmra.mxu0 %v372
    %v900 = vpop.f32.mrf.mxu0
    %v901 = vadd.f32 0.0, %v900
    %v902 = vpop.f32.mrf.mxu0
    %v903 = vadd.f32 0.0, %v902
    %904 = vmatmul.bf16.gmra.mxu0 %v373
    %v905 = vpop.f32.mrf.mxu0
    %v906 = vadd.f32 0.0, %v905
    %v907 = vpop.f32.mrf.mxu0
    %v908 = vadd.f32 0.0, %v907
    %909 = vmatmul.bf16.gmra.mxu0 %v374
    %v910 = vpop.f32.mrf.mxu0
    %v911 = vadd.f32 0.0, %v910
    %v912 = vpop.f32.mrf.mxu0
    %v913 = vadd.f32 0.0, %v912
    %914 = vmatmul.bf16.gmra.mxu0 %v375
    %v915 = vpop.f32.mrf.mxu0
    %v916 = vadd.f32 0.0, %v915
    %v917 = vpop.f32.mrf.mxu0
    %v918 = vadd.f32 0.0, %v917
    %919 = vmatmul.bf16.gmra.mxu0 %v376
    %v920 = vpop.f32.mrf.mxu0
    %v921 = vadd.f32 0.0, %v920
    %v922 = vpop.f32.mrf.mxu0
    %v923 = vadd.f32 0.0, %v922
    %924 = vmatmul.bf16.gmra.mxu0 %v377
    %v925 = vpop.f32.mrf.mxu0
    %v926 = vadd.f32 0.0, %v925
    %v927 = vpop.f32.mrf.mxu0
    %v928 = vadd.f32 0.0, %v927
    %929 = vmatmul.bf16.gmra.mxu0 %v378
    %v930 = vpop.f32.mrf.mxu0
    %v931 = vadd.f32 0.0, %v930
    %v932 = vpop.f32.mrf.mxu0
    %v933 = vadd.f32 0.0, %v932
    %934 = vmatmul.bf16.gmra.mxu0 %v379
    %v935 = vpop.f32.mrf.mxu0
    %v936 = vadd.f32 0.0, %v935
    %v937 = vpop.f32.mrf.mxu0
    %v938 = vadd.f32 0.0, %v937
    %939 = vmatmul.bf16.gmra.mxu0 %v380
    %v940 = vpop.f32.mrf.mxu0
    %v941 = vadd.f32 0.0, %v940
    %v942 = vpop.f32.mrf.mxu0
    %v943 = vadd.f32 0.0, %v942
    %944 = vmatmul.bf16.gmra.mxu0 %v381
    %v945 = vpop.f32.mrf.mxu0
    %v946 = vadd.f32 0.0, %v945
    %v947 = vpop.f32.mrf.mxu0
    %v948 = vadd.f32 0.0, %v947
    %949 = vmatmul.bf16.gmra.mxu0 %v382
    %v950 = vpop.f32.mrf.mxu0
    %v951 = vadd.f32 0.0, %v950
    %v952 = vpop.f32.mrf.mxu0
    %v953 = vadd.f32 0.0, %v952
    %954 = vmatmul.bf16.gmra.mxu0 %v383
    %v955 = vpop.f32.mrf.mxu0
    %v956 = vadd.f32 0.0, %v955
    %v957 = vpop.f32.mrf.mxu0
    %v958 = vadd.f32 0.0, %v957
    %959 = vmatmul.bf16.gmra.mxu0 %v384
    %v960 = vpop.f32.mrf.mxu0
    %v961 = vadd.f32 0.0, %v960
    %v962 = vpop.f32.mrf.mxu0
    %v963 = vadd.f32 0.0, %v962
    %964 = vmatmul.bf16.gmra.mxu0 %v385
    %v965 = vpop.f32.mrf.mxu0
    %v966 = vadd.f32 0.0, %v965
    %v967 = vpop.f32.mrf.mxu0
    %v968 = vadd.f32 0.0, %v967
    %969 = vmatmul.bf16.gmra.mxu0 %v386
    %v970 = vpop.f32.mrf.mxu0
    %v971 = vadd.f32 0.0, %v970
    %v972 = vpop.f32.mrf.mxu0
    %v973 = vadd.f32 0.0, %v972
    %974 = vmatmul.bf16.gmra.mxu0 %v387
    %v975 = vpop.f32.mrf.mxu0
    %v976 = vadd.f32 0.0, %v975
    %v977 = vpop.f32.mrf.mxu0
    %v978 = vadd.f32 0.0, %v977
    %979 = vmatmul.bf16.gmra.mxu0 %v388
    %v980 = vpop.f32.mrf.mxu0
    %v981 = vadd.f32 0.0, %v980
    %v982 = vpop.f32.mrf.mxu0
    %v983 = vadd.f32 0.0, %v982
    %984 = vmatmul.bf16.gmra.mxu0 %v389
    %v985 = vpop.f32.mrf.mxu0
    %v986 = vadd.f32 0.0, %v985
    %v987 = vpop.f32.mrf.mxu0
    %v988 = vadd.f32 0.0, %v987
    %989 = vmatmul.bf16.gmra.mxu0 %v390
    %v990 = vpop.f32.mrf.mxu0
    %v991 = vadd.f32 0.0, %v990
    %v992 = vpop.f32.mrf.mxu0
    %v993 = vadd.f32 0.0, %v992
    %994 = vmatmul.bf16.gmra.mxu0 %v391
    %v995 = vpop.f32.mrf.mxu0
    %v996 = vadd.f32 0.0, %v995
    %v997 = vpop.f32.mrf.mxu0
    %v998 = vadd.f32 0.0, %v997
    %999 = vmatmul.bf16.gmra.mxu0 %v392
    %v1000 = vpop.f32.mrf.mxu0
    %v1001 = vadd.f32 0.0, %v1000
    %v1002 = vpop.f32.mrf.mxu0
    %v1003 = vadd.f32 0.0, %v1002
    %1004 = vmatmul.bf16.gmra.mxu0 %v393
    %v1005 = vpop.f32.mrf.mxu0
    %v1006 = vadd.f32 0.0, %v1005
    %v1007 = vpop.f32.mrf.mxu0
    %v1008 = vadd.f32 0.0, %v1007
    %1009 = vmatmul.bf16.gmra.mxu0 %v394
    %v1010 = vpop.f32.mrf.mxu0
    %v1011 = vadd.f32 0.0, %v1010
    %v1012 = vpop.f32.mrf.mxu0
    %v1013 = vadd.f32 0.0, %v1012
    %1014 = vmatmul.bf16.gmra.mxu0 %v395
    %v1015 = vpop.f32.mrf.mxu0
    %v1016 = vadd.f32 0.0, %v1015
    %v1017 = vpop.f32.mrf.mxu0
    %v1018 = vadd.f32 0.0, %v1017
    %1019 = vmatmul.bf16.gmra.mxu0 %v396
    %v1020 = vpop.f32.mrf.mxu0
    %v1021 = vadd.f32 0.0, %v1020
    %v1022 = vpop.f32.mrf.mxu0
    %v1023 = vadd.f32 0.0, %v1022
    %1024 = vmatmul.bf16.gmra.mxu0 %v397
    %v1025 = vpop.f32.mrf.mxu0
    %v1026 = vadd.f32 0.0, %v1025
    %v1027 = vpop.f32.mrf.mxu0
    %v1028 = vadd.f32 0.0, %v1027
    %1029 = vmatmul.bf16.gmra.mxu0 %v398
    %v1030 = vpop.f32.mrf.mxu0
    %v1031 = vadd.f32 0.0, %v1030
    %v1032 = vpop.f32.mrf.mxu0
    %v1033 = vadd.f32 0.0, %v1032
    %1034 = vmatmul.bf16.gmra.mxu0 %v399
    %v1035 = vpop.f32.mrf.mxu0
    %v1036 = vadd.f32 0.0, %v1035
    %v1037 = vpop.f32.mrf.mxu0
    %v1038 = vadd.f32 0.0, %v1037
    %1039 = vmatmul.bf16.gmra.mxu0 %v400
    %v1040 = vpop.f32.mrf.mxu0
    %v1041 = vadd.f32 0.0, %v1040
    %v1042 = vpop.f32.mrf.mxu0
    %v1043 = vadd.f32 0.0, %v1042
    %1044 = vmatmul.bf16.gmra.mxu0 %v401
    %v1045 = vpop.f32.mrf.mxu0
    %v1046 = vadd.f32 0.0, %v1045
    %v1047 = vpop.f32.mrf.mxu0
    %v1048 = vadd.f32 0.0, %v1047
    %1049 = vdwg.mxu0
    %v1050 = vmax.f32 %v542, %v547
    %v1051 = vmax.f32 %v544, %v549
    %v1052 = vmax.f32 %v1050, %v552
    %v1053 = vmax.f32 %v1051, %v554
    %v1054 = vmax.f32 %v1052, %v557
    %v1055 = vmax.f32 %v1053, %v559
    %v1056 = vmax.f32 %v1054, %v562
    %v1057 = vmax.f32 %v1055, %v564
    %v1058 = vmax.f32 %v1056, %v567
    %v1059 = vmax.f32 %v1057, %v569
    %v1060 = vmax.f32 %v1058, %v572
    %v1061 = vmax.f32 %v1059, %v574
    %v1062 = vmax.f32 %v1060, %v577
    %v1063 = vmax.f32 %v1061, %v579
    %v1064 = vmax.f32 %v1062, %v582
    %v1065 = vmax.f32 %v1063, %v584
    %v1066 = vmax.f32 %v1064, %v587
    %v1067 = vmax.f32 %v1065, %v589
    %v1068 = vmax.f32 %v1066, %v592
    %v1069 = vmax.f32 %v1067, %v594
    %v1070 = vmax.f32 %v1068, %v597
    %v1071 = vmax.f32 %v1069, %v599
    %v1072 = vmax.f32 %v1070, %v602
    %v1073 = vmax.f32 %v1072, %v1071
    %v1074 = vrot.slane %v1073, 4
    %v1075 = vmax.f32 %v1073, %v1074
    %v1076 = vrot.slane %v1075, 2
    %v1077 = vmax.f32 %v1075, %v1076
    %v1078 = vrot.slane %v1077, 1
    %v1079 = vmax.f32 %v1077, %v1078
    %v1080 = vmax.f32 %v801, %v806
    %v1081 = vmax.f32 %v803, %v808
    %v1082 = vmax.f32 %v1080, %v811
    %v1083 = vmax.f32 %v1081, %v813
    %v1084 = vmax.f32 %v1082, %v816
    %v1085 = vmax.f32 %v1083, %v818
    %v1086 = vmax.f32 %v1084, %v821
    %v1087 = vmax.f32 %v1085, %v823
    %v1088 = vmax.f32 %v1086, %v826
    %v1089 = vmax.f32 %v1087, %v828
    %v1090 = vmax.f32 %v1088, %v831
    %v1091 = vmax.f32 %v1089, %v833
    %v1092 = vmax.f32 %v1090, %v836
    %v1093 = vmax.f32 %v1091, %v838
    %v1094 = vmax.f32 %v1092, %v841
    %v1095 = vmax.f32 %v1093, %v843
    %v1096 = vmax.f32 %v1094, %v846
    %v1097 = vmax.f32 %v1095, %v848
    %v1098 = vmax.f32 %v1096, %v851
    %v1099 = vmax.f32 %v1097, %v853
    %v1100 = vmax.f32 %v1098, %v856
    %v1101 = vmax.f32 %v1099, %v858
    %v1102 = vmax.f32 %v1100, %v861
    %v1103 = vmax.f32 %v1102, %v1101
    %v1104 = vrot.slane %v1103, 4
    %v1105 = vmax.f32 %v1103, %v1104
    %v1106 = vrot.slane %v1105, 2
    %v1107 = vmax.f32 %v1105, %v1106
    %v1108 = vrot.slane %v1107, 1
    %v1109 = vmax.f32 %v1107, %v1108
    %v1110 = vmax.f32 %v604, %v609
    %v1111 = vmax.f32 %v607, %v612
    %v1112 = vmax.f32 %v1110, %v614
    %v1113 = vmax.f32 %v1111, %v617
    %v1114 = vmax.f32 %v1112, %v619
    %v1115 = vmax.f32 %v1113, %v622
    %v1116 = vmax.f32 %v1114, %v624
    %v1117 = vmax.f32 %v1115, %v627
    %v1118 = vmax.f32 %v1116, %v629
    %v1119 = vmax.f32 %v1117, %v632
    %v1120 = vmax.f32 %v1118, %v634
    %v1121 = vmax.f32 %v1119, %v637
    %v1122 = vmax.f32 %v1120, %v639
    %v1123 = vmax.f32 %v1121, %v642
    %v1124 = vmax.f32 %v1122, %v644
    %v1125 = vmax.f32 %v1123, %v647
    %v1126 = vmax.f32 %v1124, %v649
    %v1127 = vmax.f32 %v1125, %v652
    %v1128 = vmax.f32 %v1126, %v654
    %v1129 = vmax.f32 %v1127, %v657
    %v1130 = vmax.f32 %v1128, %v659
    %v1131 = vmax.f32 %v1129, %v662
    %v1132 = vmax.f32 %v1130, %v664
    %v1133 = vmax.f32 %v1132, %v1131
    %v1134 = vrot.slane %v1133, 4
    %v1135 = vmax.f32 %v1133, %v1134
    %v1136 = vrot.slane %v1135, 2
    %v1137 = vmax.f32 %v1135, %v1136
    %v1138 = vrot.slane %v1137, 1
    %v1139 = vmax.f32 %v1137, %v1138
    %v1140 = vmax.f32 %v863, %v868
    %v1141 = vmax.f32 %v866, %v871
    %v1142 = vmax.f32 %v1140, %v873
    %v1143 = vmax.f32 %v1141, %v876
    %v1144 = vmax.f32 %v1142, %v878
    %v1145 = vmax.f32 %v1143, %v881
    %v1146 = vmax.f32 %v1144, %v883
    %v1147 = vmax.f32 %v1145, %v886
    %v1148 = vmax.f32 %v1146, %v888
    %v1149 = vmax.f32 %v1147, %v891
    %v1150 = vmax.f32 %v1148, %v893
    %v1151 = vmax.f32 %v1149, %v896
    %v1152 = vmax.f32 %v1150, %v898
    %v1153 = vmax.f32 %v1151, %v901
    %v1154 = vmax.f32 %v1152, %v903
    %v1155 = vmax.f32 %v1153, %v906
    %v1156 = vmax.f32 %v1154, %v908
    %v1157 = vmax.f32 %v1155, %v911
    %v1158 = vmax.f32 %v1156, %v913
    %v1159 = vmax.f32 %v1157, %v916
    %v1160 = vmax.f32 %v1158, %v918
    %v1161 = vmax.f32 %v1159, %v921
    %v1162 = vmax.f32 %v1160, %v923
    %v1163 = vmax.f32 %v1162, %v1161
    %v1164 = vrot.slane %v1163, 4
    %v1165 = vmax.f32 %v1163, %v1164
    %v1166 = vrot.slane %v1165, 2
    %v1167 = vmax.f32 %v1165, %v1166
    %v1168 = vrot.slane %v1167, 1
    %v1169 = vmax.f32 %v1167, %v1168
    %v1170 = vmax.f32 %v667, %v672
    %v1171 = vmax.f32 %v669, %v674
    %v1172 = vmax.f32 %v1170, %v677
    %v1173 = vmax.f32 %v1171, %v679
    %v1174 = vmax.f32 %v1172, %v682
    %v1175 = vmax.f32 %v1173, %v684
    %v1176 = vmax.f32 %v1174, %v687
    %v1177 = vmax.f32 %v1175, %v689
    %v1178 = vmax.f32 %v1176, %v692
    %v1179 = vmax.f32 %v1177, %v694
    %v1180 = vmax.f32 %v1178, %v697
    %v1181 = vmax.f32 %v1179, %v699
    %v1182 = vmax.f32 %v1180, %v702
    %v1183 = vmax.f32 %v1181, %v704
    %v1184 = vmax.f32 %v1182, %v707
    %v1185 = vmax.f32 %v1183, %v709
    %v1186 = vmax.f32 %v1184, %v712
    %v1187 = vmax.f32 %v1185, %v714
    %v1188 = vmax.f32 %v1186, %v717
    %v1189 = vmax.f32 %v1187, %v719
    %v1190 = vmax.f32 %v1188, %v722
    %v1191 = vmax.f32 %v1189, %v724
    %v1192 = vmax.f32 %v1190, %v727
    %v1193 = vmax.f32 %v1192, %v1191
    %v1194 = vrot.slane %v1193, 4
    %v1195 = vmax.f32 %v1193, %v1194
    %v1196 = vrot.slane %v1195, 2
    %v1197 = vmax.f32 %v1195, %v1196
    %v1198 = vrot.slane %v1197, 1
    %v1199 = vmax.f32 %v1197, %v1198
    %v1200 = vmax.f32 %v926, %v931
    %v1201 = vmax.f32 %v928, %v933
    %v1202 = vmax.f32 %v1200, %v936
    %v1203 = vmax.f32 %v1201, %v938
    %v1204 = vmax.f32 %v1202, %v941
    %v1205 = vmax.f32 %v1203, %v943
    %v1206 = vmax.f32 %v1204, %v946
    %v1207 = vmax.f32 %v1205, %v948
    %v1208 = vmax.f32 %v1206, %v951
    %v1209 = vmax.f32 %v1207, %v953
    %v1210 = vmax.f32 %v1208, %v956
    %v1211 = vmax.f32 %v1209, %v958
    %v1212 = vmax.f32 %v1210, %v961
    %v1213 = vmax.f32 %v1211, %v963
    %v1214 = vmax.f32 %v1212, %v966
    %v1215 = vmax.f32 %v1213, %v968
    %v1216 = vmax.f32 %v1214, %v971
    %v1217 = vmax.f32 %v1215, %v973
    %v1218 = vmax.f32 %v1216, %v976
    %v1219 = vmax.f32 %v1217, %v978
    %v1220 = vmax.f32 %v1218, %v981
    %v1221 = vmax.f32 %v1219, %v983
    %v1222 = vmax.f32 %v1220, %v986
    %v1223 = vmax.f32 %v1222, %v1221
    %v1224 = vrot.slane %v1223, 4
    %v1225 = vmax.f32 %v1223, %v1224
    %v1226 = vrot.slane %v1225, 2
    %v1227 = vmax.f32 %v1225, %v1226
    %v1228 = vrot.slane %v1227, 1
    %v1229 = vmax.f32 %v1227, %v1228
    %v1230 = vmax.f32 %v729, %v734
    %v1231 = vmax.f32 %v732, %v737
    %v1232 = vmax.f32 %v1230, %v739
    %v1233 = vmax.f32 %v1231, %v742
    %v1234 = vmax.f32 %v1232, %v744
    %v1235 = vmax.f32 %v1233, %v747
    %v1236 = vmax.f32 %v1234, %v749
    %v1237 = vmax.f32 %v1235, %v752
    %v1238 = vmax.f32 %v1236, %v754
    %v1239 = vmax.f32 %v1237, %v757
    %v1240 = vmax.f32 %v1238, %v759
    %v1241 = vmax.f32 %v1239, %v762
    %v1242 = vmax.f32 %v1240, %v764
    %v1243 = vmax.f32 %v1241, %v767
    %v1244 = vmax.f32 %v1242, %v769
    %v1245 = vmax.f32 %v1243, %v772
    %v1246 = vmax.f32 %v1244, %v774
    %v1247 = vmax.f32 %v1245, %v777
    %v1248 = vmax.f32 %v1246, %v779
    %v1249 = vmax.f32 %v1247, %v782
    %v1250 = vmax.f32 %v1248, %v784
    %v1251 = vmax.f32 %v1249, %v787
    %v1252 = vmax.f32 %v1250, %v789
    %v1253 = vmax.f32 %v1252, %v1251
    %v1254 = vrot.slane %v1253, 4
    %v1255 = vmax.f32 %v1253, %v1254
    %v1256 = vrot.slane %v1255, 2
    %v1257 = vmax.f32 %v1255, %v1256
    %v1258 = vrot.slane %v1257, 1
    %v1259 = vmax.f32 %v1257, %v1258
    %v1260 = vmax.f32 %v988, %v993
    %v1261 = vmax.f32 %v991, %v996
    %v1262 = vmax.f32 %v1260, %v998
    %v1263 = vmax.f32 %v1261, %v1001
    %v1264 = vmax.f32 %v1262, %v1003
    %v1265 = vmax.f32 %v1263, %v1006
    %v1266 = vmax.f32 %v1264, %v1008
    %v1267 = vmax.f32 %v1265, %v1011
    %v1268 = vmax.f32 %v1266, %v1013
    %v1269 = vmax.f32 %v1267, %v1016
    %v1270 = vmax.f32 %v1268, %v1018
    %v1271 = vmax.f32 %v1269, %v1021
    %v1272 = vmax.f32 %v1270, %v1023
    %v1273 = vmax.f32 %v1271, %v1026
    %v1274 = vmax.f32 %v1272, %v1028
    %v1275 = vmax.f32 %v1273, %v1031
    %v1276 = vmax.f32 %v1274, %v1033
    %v1277 = vmax.f32 %v1275, %v1036
    %v1278 = vmax.f32 %v1276, %v1038
    %v1279 = vmax.f32 %v1277, %v1041
    %v1280 = vmax.f32 %v1278, %v1043
    %v1281 = vmax.f32 %v1279, %v1046
    %v1282 = vmax.f32 %v1280, %v1048
    %v1283 = vmax.f32 %v1282, %v1281
    %v1284 = vrot.slane %v1283, 4
    %v1285 = vmax.f32 %v1283, %v1284
    %v1286 = vrot.slane %v1285, 2
    %v1287 = vmax.f32 %v1285, %v1286
    %v1288 = vrot.slane %v1287, 1
    %v1289 = vmax.f32 %v1287, %v1288
    %vm1290 = vcmask 1040384
    %v1291 = vsel %vm1290, %v1079, %v1139
    %v1292 = vsel %vm1290, %v1109, %v1169
    %vm1293 = vcmask 1041408
    %v1294 = vsel %vm1293, %v1291, %v1199
    %v1295 = vsel %vm1293, %v1292, %v1229
    %vm1296 = vcmask 1042432
    %v1297 = vsel %vm1296, %v1294, %v1259
    %v1298 = vsel %vm1296, %v1295, %v1289
    %v1299 = vld [vmem:[%s2] sm:$0x3]
    %v1301 = vperm.slane %v1299, 0
    %v1302 = vperm.slane %v1299, 1
    %v1305 = vadd.f32 %v1297, %v1301
    %v1306 = vadd.f32 %v1298, %v1302
    %v1307 = vpack.c.bf16 %v1305, %v1305
    %v1308 = vpack.c.bf16 %v1306, %v1306
    %v1309 = vld [vmem:[%s3] sm:$0xf]
    %v1310 = vld [vmem:[%s3 + $0x4] sm:$0xf]
    %v1311 = vld [vmem:[%s3 + $0x8] sm:$0xf]
    %v1312 = vld [vmem:[%s3 + $0xc] sm:$0xf]
    %v1313 = vld [vmem:[%s3 + $0x10] sm:$0xf]
    %v1314 = vld [vmem:[%s3 + $0x14] sm:$0xf]
    %v1315 = vld [vmem:[%s3 + $0x18] sm:$0xf]
    %v1316 = vld [vmem:[%s3 + $0x1c] sm:$0xf]
    %v1317 = vld [vmem:[%s3 + $0x20] sm:$0xf]
    %v1318 = vld [vmem:[%s3 + $0x24] sm:$0xf]
    %v1319 = vld [vmem:[%s3 + $0x28] sm:$0xf]
    %v1320 = vld [vmem:[%s3 + $0x2c] sm:$0xf]
    %v1321 = vld [vmem:[%s3 + $0x30] sm:$0xf]
    %v1322 = vld [vmem:[%s3 + $0x34] sm:$0xf]
    %v1323 = vld [vmem:[%s3 + $0x38] sm:$0xf]
    %v1324 = vld [vmem:[%s3 + $0x3c] sm:$0xf]
    %v1325 = vld [vmem:[%s3 + $0x40] sm:$0xf]
    %v1326 = vld [vmem:[%s3 + $0x44] sm:$0xf]
    %v1327 = vld [vmem:[%s3 + $0x48] sm:$0xf]
    %v1328 = vld [vmem:[%s3 + $0x4c] sm:$0xf]
    %v1329 = vld [vmem:[%s3 + $0x50] sm:$0xf]
    %v1330 = vld [vmem:[%s3 + $0x54] sm:$0xf]
    %v1331 = vld [vmem:[%s3 + $0x58] sm:$0xf]
    %v1332 = vld [vmem:[%s3 + $0x5c] sm:$0xf]
    %v1333 = vld [vmem:[%s3 + $0x60] sm:$0xf]
    %v1334 = vld [vmem:[%s3 + $0x64] sm:$0xf]
    %v1335 = vld [vmem:[%s3 + $0x68] sm:$0xf]
    %v1336 = vld [vmem:[%s3 + $0x6c] sm:$0xf]
    %v1337 = vld [vmem:[%s3 + $0x70] sm:$0xf]
    %v1338 = vld [vmem:[%s3 + $0x74] sm:$0xf]
    %v1339 = vld [vmem:[%s3 + $0x78] sm:$0xf]
    %v1340 = vld [vmem:[%s3 + $0x7c] sm:$0xf]
    %v1341 = vld [vmem:[%s4] sm:$0x1]
    %v1343 = vperm.slane %v1341, 0
    %v1377 = vunpack.c.l.b16 %v1309
    %v1378 = vunpack.c.l.b16 %v1310
    %v1379 = vunpack.c.l.b16 %v1311
    %v1380 = vunpack.c.l.b16 %v1312
    %v1381 = vunpack.c.l.b16 %v1313
    %v1382 = vunpack.c.l.b16 %v1314
    %v1383 = vunpack.c.l.b16 %v1315
    %v1384 = vunpack.c.l.b16 %v1316
    %v1385 = vunpack.c.l.b16 %v1317
    %v1386 = vunpack.c.l.b16 %v1318
    %v1387 = vunpack.c.l.b16 %v1319
    %v1388 = vunpack.c.l.b16 %v1320
    %v1389 = vunpack.c.l.b16 %v1321
    %v1390 = vunpack.c.l.b16 %v1322
    %v1391 = vunpack.c.l.b16 %v1323
    %v1392 = vunpack.c.l.b16 %v1324
    %v1393 = vunpack.c.l.b16 %v1325
    %v1394 = vunpack.c.l.b16 %v1326
    %v1395 = vunpack.c.l.b16 %v1327
    %v1396 = vunpack.c.l.b16 %v1328
    %v1397 = vunpack.c.l.b16 %v1329
    %v1398 = vunpack.c.l.b16 %v1330
    %v1399 = vunpack.c.l.b16 %v1331
    %v1400 = vunpack.c.l.b16 %v1332
    %v1401 = vunpack.c.l.b16 %v1333
    %v1402 = vunpack.c.l.b16 %v1334
    %v1403 = vunpack.c.l.b16 %v1335
    %v1404 = vunpack.c.l.b16 %v1336
    %v1405 = vunpack.c.l.b16 %v1337
    %v1406 = vunpack.c.l.b16 %v1338
    %v1407 = vunpack.c.l.b16 %v1339
    %v1408 = vunpack.c.l.b16 %v1340
    %v1409 = vpack.c.b16 %v1378, %v1377
    %v1410 = vpack.c.b16 %v1380, %v1379
    %v1411 = vpack.c.b16 %v1382, %v1381
    %v1412 = vpack.c.b16 %v1384, %v1383
    %v1413 = vpack.c.b16 %v1386, %v1385
    %v1414 = vpack.c.b16 %v1388, %v1387
    %v1415 = vpack.c.b16 %v1390, %v1389
    %v1416 = vpack.c.b16 %v1392, %v1391
    %v1417 = vpack.c.b16 %v1394, %v1393
    %v1418 = vpack.c.b16 %v1396, %v1395
    %v1419 = vpack.c.b16 %v1398, %v1397
    %v1420 = vpack.c.b16 %v1400, %v1399
    %v1421 = vpack.c.b16 %v1402, %v1401
    %v1422 = vpack.c.b16 %v1404, %v1403
    %v1423 = vpack.c.b16 %v1406, %v1405
    %v1424 = vpack.c.b16 %v1408, %v1407
    %1441 = vmatpush.bf16.msra.mxu0 %v1416
    %1442 = vmatpush.bf16.msra.mxu0 %v1415
    %1443 = vmatpush.bf16.msra.mxu0 %v1414
    %1444 = vmatpush.bf16.msra.mxu0 %v1413
    %1445 = vmatpush.bf16.msra.mxu0 %v1412
    %1446 = vmatpush.bf16.msra.mxu0 %v1411
    %1447 = vmatpush.bf16.msra.mxu0 %v1410
    %1448 = vmatpush.bf16.msra.mxu0 %v1409
    %1449 = vmatmul.bf16.gmra.mxu0 %v1307
    %v1450 = vpop.f32.mrf.mxu0
    %v1451 = vadd.f32 %v1343, %v1450
    %v1452 = vpop.f32.mrf.mxu0
    %1453 = vdwg.mxu0
    %1454 = vmatpush.bf16.msra.mxu0 %v1424
    %1455 = vmatpush.bf16.msra.mxu0 %v1423
    %1456 = vmatpush.bf16.msra.mxu0 %v1422
    %1457 = vmatpush.bf16.msra.mxu0 %v1421
    %1458 = vmatpush.bf16.msra.mxu0 %v1420
    %1459 = vmatpush.bf16.msra.mxu0 %v1419
    %1460 = vmatpush.bf16.msra.mxu0 %v1418
    %1461 = vmatpush.bf16.msra.mxu0 %v1417
    %1462 = vmatmul.bf16.gmra.mxu0 %v1308
    %v1463 = vpop.f32.mrf.mxu0
    %v1464 = vadd.f32 %v1451, %v1463
    %v1465 = vpop.f32.mrf.mxu0
    %1466 = vdwg.mxu0
    %vm1467 = vcmask 1043456
    %v1468 = vsel %vm1467, %v1464, 0.0
    %v1469 = vrot.slane %v1468, 4
    %v1470 = vadd.f32 %v1468, %v1469
    %v1471 = vrot.slane %v1470, 2
    %v1472 = vadd.f32 %v1470, %v1471
    %v1473 = vrot.slane %v1472, 1
    %v1474 = vadd.f32 %v1472, %v1473
    %v1475 = vrcp.pop 4.0
    %v1476 = vmul.f32 4.0, %v1475
    %v1477 = vsub.f32 1.0, %v1476
    %v1478 = vmul.f32 %v1475, %v1477
    %v1479 = vadd.f32 %v1475, %v1478
    %vm1480 = vweird.f32 %v1475
    %v1481 = vsel %vm1480, %v1475, %v1479
    %v1482 = vmul.f32 %v1474, %v1481
    %v1483 = vsub.f32 %v1464, %v1482
    %v1484 = vmul.f32 %v1483, %v1483
    %v1485 = vsel %vm1467, %v1484, 0.0
    %v1486 = vrot.slane %v1485, 4
    %v1487 = vadd.f32 %v1485, %v1486
    %v1488 = vrot.slane %v1487, 2
    %v1489 = vadd.f32 %v1487, %v1488
    %v1490 = vrot.slane %v1489, 1
    %v1491 = vadd.f32 %v1489, %v1490
    %v1492 = vmul.f32 %v1491, %v1481
    %v1493 = vadd.f32 %v1492, 1e-05
    %v1494 = vrsqrt.pop %v1493
    %v1495 = vmul.f32 %v1494, %v1493
    %v1496 = vmul.f32 %v1495, %v1494
    %v1497 = vmul.f32 0.5, %v1496
    %v1498 = vsub.f32 1.5, %v1497
    %v1499 = vmul.f32 %v1494, %v1498
    %vm1500 = vweird.f32 %v1493
    %vm1501 = vweird.f32 %v1494
    %vm1502 = vmor %vm1500, %vm1501
    %v1503 = vsel %vm1502, %v1494, %v1499
    %v1504 = vmul.f32 %v1483, %v1503
    %v1505 = vld [vmem:[%s5] sm:$0x1]
    %v1507 = vperm.slane %v1505, 0
    %v1509 = vmul.f32 %v1504, %v1507
    %v1510 = vld [vmem:[%s6] sm:$0x1]
    %v1512 = vperm.slane %v1510, 0
    %v1514 = vadd.f32 %v1509, %v1512
    %v1515 = vmax.f32 %v1514, 0.0
    %v1516 = vpack.c.bf16 %v1515, %v1515
    %v1517 = vld [vmem:[%s7] sm:$0xf]
    %v1518 = vld [vmem:[%s7 + $0x4] sm:$0xf]
    %v1519 = vld [vmem:[%s7 + $0x8] sm:$0xf]
    %v1520 = vld [vmem:[%s7 + $0xc] sm:$0xf]
    %v1521 = vld [vmem:[%s7 + $0x10] sm:$0xf]
    %v1522 = vld [vmem:[%s7 + $0x14] sm:$0xf]
    %v1523 = vld [vmem:[%s7 + $0x18] sm:$0xf]
    %v1524 = vld [vmem:[%s7 + $0x1c] sm:$0xf]
    %v1525 = vld [vmem:[%s7 + $0x20] sm:$0xf]
    %v1526 = vld [vmem:[%s7 + $0x24] sm:$0xf]
    %v1527 = vld [vmem:[%s7 + $0x28] sm:$0xf]
    %v1528 = vld [vmem:[%s7 + $0x2c] sm:$0xf]
    %v1529 = vld [vmem:[%s7 + $0x30] sm:$0xf]
    %v1530 = vld [vmem:[%s7 + $0x34] sm:$0xf]
    %v1531 = vld [vmem:[%s7 + $0x38] sm:$0xf]
    %v1532 = vld [vmem:[%s7 + $0x3c] sm:$0xf]
    %v1533 = vld [vmem:[%s8] sm:$0x1]
    %v1535 = vperm.slane %v1533, 0
    %v1553 = vunpack.c.l.b16 %v1517
    %v1554 = vunpack.c.l.b16 %v1518
    %v1555 = vunpack.c.l.b16 %v1519
    %v1556 = vunpack.c.l.b16 %v1520
    %v1557 = vunpack.c.l.b16 %v1521
    %v1558 = vunpack.c.l.b16 %v1522
    %v1559 = vunpack.c.l.b16 %v1523
    %v1560 = vunpack.c.l.b16 %v1524
    %v1561 = vunpack.c.l.b16 %v1525
    %v1562 = vunpack.c.l.b16 %v1526
    %v1563 = vunpack.c.l.b16 %v1527
    %v1564 = vunpack.c.l.b16 %v1528
    %v1565 = vunpack.c.l.b16 %v1529
    %v1566 = vunpack.c.l.b16 %v1530
    %v1567 = vunpack.c.l.b16 %v1531
    %v1568 = vunpack.c.l.b16 %v1532
    %v1569 = vpack.c.b16 %v1554, %v1553
    %v1570 = vpack.c.b16 %v1556, %v1555
    %v1571 = vpack.c.b16 %v1558, %v1557
    %v1572 = vpack.c.b16 %v1560, %v1559
    %v1573 = vpack.c.b16 %v1562, %v1561
    %v1574 = vpack.c.b16 %v1564, %v1563
    %v1575 = vpack.c.b16 %v1566, %v1565
    %v1576 = vpack.c.b16 %v1568, %v1567
    %1585 = vmatpush.bf16.msra.mxu0 %v1576
    %1586 = vmatpush.bf16.msra.mxu0 %v1575
    %1587 = vmatpush.bf16.msra.mxu0 %v1574
    %1588 = vmatpush.bf16.msra.mxu0 %v1573
    %1589 = vmatpush.bf16.msra.mxu0 %v1572
    %1590 = vmatpush.bf16.msra.mxu0 %v1571
    %1591 = vmatpush.bf16.msra.mxu0 %v1570
    %1592 = vmatpush.bf16.msra.mxu0 %v1569
    %1593 = vmatmul.bf16.gmra.mxu0 %v1516
    %v1594 = vpop.f32.mrf.mxu0
    %v1595 = vadd.f32 %v1535, %v1594
    %v1596 = vpop.f32.mrf.mxu0
    %1597 = vdwg.mxu0
    %v1598 = vsel %vm1467, %v1595, -inf
    %1599 = vmax.xlane.f32.xlu0 %v1598
    %v1600 = vpop.xlane.xlu0 %1599
    %v1601 = vsub.f32 %v1595, %v1600
    %v1602 = vmul.f32 %v1601, 1.442695
    %v1603 = vpow.pop %v1602
    %v1604 = vsel %vm1467, %v1603, 0.0
    %1605 = vadd.xlane.f32.xlu0 %v1604
    %v1606 = vpop.xlane.xlu0 %1605
    %v1607 = vlog2.pop %v1606
    %v1608 = vmul.f32 %v1607, 0.6931472
    %v1609 = vadd.f32 %v1600, %v1608
    %v1610 = vsub.f32 %v1595, %v1609
    %v1611 = vlaneseq
    %v1612 = vand.u32 %v1611, 127
    %v1613 = vld [vmem:[%s9] sm:$0xf]
    %1614 = vset.pattern.permute.xlu0 0
    %1615 = vperm.xlu0 %1614, %v1613
    %v1616 = vpop.permute.xlu0 %1615
    %vm1617 = vcmp.eq.s32.totalorder %v1612, %v1616
    %v1618 = vsel %vm1617, %v1610, 0.0
    %v1619 = vsel %vm1467, %v1618, 0.0
    %1620 = vadd.xlane.f32.xlu0 %v1619
    %v1621 = vpop.xlane.xlu0 %1620
    %v1622 = vsel %vm1467, %v1621, 0.0
    %v1623 = vrot.slane %v1622, 4
    %v1624 = vadd.f32 %v1622, %v1623
    %v1625 = vrot.slane %v1624, 2
    %v1626 = vadd.f32 %v1624, %v1625
    %v1627 = vrot.slane %v1626, 1
    %v1628 = vadd.f32 %v1626, %v1627
    %v1629 = vsub.f32 0.0, %v1628
    %v1630 = vmul.f32 %v1629, %v1481
    %vm1631 = vcmask 0
    %1632 = vst.msk [vmem:[#allocation2] sm:$0x1] %vm1631, %v1630
    // Predicated region
    $region42: #{dann_head_forward.1} parent=1 // pred_check
      _
    $region43: #{dann_head_forward.1} parent=1 // pred_check_branch
      %1634 = sbr.rel (0) target = $region45
    $region44: #{dann_head_forward.1} parent=1 // pred_region
      %1636 = vsyncadd [#allocation3], 0
      %s1638 = sshll.u32 [#allocation2], 4
      %s1639 = int_to_ptr.vmem [resolvable:$true] %s1638
      %s1640 = sshll.u32 %s10, 4
      %s1641 = int_to_ptr.hbm [resolvable:$true] %s1640
      %1643 = dma.vmem_to_hbm [thread:$0]  %s1639, 16, %s1641, [#allocation3]
    $region45: #{dann_head_forward.1} parent=1 // pred_fallthru
      _
    // Predicated region
    $region46: #{dann_head_forward.1} parent=1 // pred_check
      _
    $region47: #{dann_head_forward.1} parent=1 // pred_check_branch
      %1645 = sbr.rel (0) target = $region49
    $region48: #{dann_head_forward.1} parent=1 // pred_region
      %1647 = dma.done [#allocation3], 16
    $region49: #{dann_head_forward.1} parent=1 // pred_fallthru
      _
    %1648 = vsyncpa [#allocation3], 1

</llo_original>
